<compile_context>
chip_gen: v6e
topology: v6e:2x2x1
jax: 0.10.0
libtpu: 0.0.40
codegen_flags: <defaults>
</compile_context>

<pallas_src>
import functools

import numpy as np
import jax
import jax.numpy as jnp
from jax import lax
from jax.experimental import pallas as pl
from jax.experimental.pallas import tpu as pltpu

SIZES = (1, 2, 3, 6)
_POOL_OFFS = (0,) + tuple(int(v) for v in np.cumsum([s * s for s in SIZES]))
_N_SQ = _POOL_OFFS[-1]          # 1 + 4 + 9 + 36 = 50
_N_REST = _N_SQ - 1             # 49 (all stages except size-1)


# ----------------------------------------------------------------------------
# Host-side construction of the (linear) spatial operators.
# ----------------------------------------------------------------------------
def _adaptive_pool_matrix(in_size: int, out_size: int) -> np.ndarray:
    """1-D AdaptiveAvgPool matrix with PyTorch's bin rule."""
    P = np.zeros((out_size, in_size), np.float32)
    for i in range(out_size):
        start = (i * in_size) // out_size
        end = -((-(i + 1) * in_size) // out_size)      # ceil((i+1)*in/out)
        P[i, start:end] = 1.0 / (end - start)
    return P


def _bilinear_matrix(out_size: int, in_size: int) -> np.ndarray:
    """1-D bilinear interpolation matrix, PyTorch align_corners=False rule."""
    U = np.zeros((out_size, in_size), np.float32)
    scale = in_size / out_size
    for o in range(out_size):
        src = (o + 0.5) * scale - 0.5
        src = max(src, 0.0)
        i0 = min(int(np.floor(src)), in_size - 1)
        i1 = min(i0 + 1, in_size - 1)
        l1 = src - i0
        U[o, i0] += 1.0 - l1
        U[o, i1] += l1
    return U


def _build_stacked_spatial_mats(H: int, W: int):
    """Stacked pooling matrix P_T (HW, 50) and upsample matrix U_restT (49, HW)."""
    p_rows, u_rows = [], []
    for s in SIZES:
        Py = _adaptive_pool_matrix(H, s)
        Px = _adaptive_pool_matrix(W, s)
        p_rows.append(np.kron(Py, Px))                 # (s*s, HW)
        if s != 1:                                     # size-1 upsample == broadcast
            Uy = _bilinear_matrix(H, s)
            Ux = _bilinear_matrix(W, s)
            u_rows.append(np.kron(Uy, Ux).T)           # (s*s, HW)
    p_T = np.concatenate(p_rows, axis=0).T             # (HW, 50)
    u_restT = np.concatenate(u_rows, axis=0)           # (49, HW)
    return jnp.asarray(p_T, jnp.bfloat16), jnp.asarray(u_restT, jnp.bfloat16)


# ----------------------------------------------------------------------------
# Phase 1: pooled reduction over HW tiles + stage 1x1 convs (tiny finalize).
# ----------------------------------------------------------------------------
def _pool_stage_kernel(feats_ref, pT_ref, wc_ref, bc_ref, wbs_ref,
                       y1_ref, yrest_ref, pooled_ref):
    h = pl.program_id(1)

    @pl.when(h == 0)
    def _():
        pooled_ref[...] = jnp.zeros_like(pooled_ref)

    # Single stacked pooling matmul: (C, T) @ (T, 50), f32 accumulation.
    pooled_ref[...] += jnp.dot(feats_ref[...], pT_ref[...],
                               preferred_element_type=jnp.float32)

    @pl.when(h == pl.num_programs(1) - 1)
    def _():
        pooled = pooled_ref[...].astype(jnp.bfloat16)              # (C, 50)
        ys = []
        for i in range(len(SIZES)):
            lo, hi = _POOL_OFFS[i], _POOL_OFFS[i + 1]
            p_s = pooled[:, lo:hi]                                 # (C, s*s)
            # 1x1 stage conv + ReLU (channels-first: W @ x + b).
            z = jnp.dot(wc_ref[i], p_s,
                        preferred_element_type=jnp.float32) + bc_ref[i]
            z = jnp.maximum(z, 0.0).astype(jnp.bfloat16)           # (Cm, s*s)
            # Re-associated bottleneck slice applied BEFORE upsampling.
            ys.append(jnp.dot(wbs_ref[i], z,
                              preferred_element_type=jnp.float32))  # (C, s*s)
        y1_ref[...] = ys[0].astype(y1_ref.dtype)                   # (C, 1)
        yrest_ref[...] = jnp.concatenate(ys[1:], axis=1).astype(yrest_ref.dtype)


# ----------------------------------------------------------------------------
# Phase 2: HW-tiled apply (feats bottleneck + upsampled stage contributions).
# ----------------------------------------------------------------------------
def _apply_kernel(feats_ref, uT_ref, y1_ref, yrest_ref, wbf_ref, bb_ref, out_ref):
    acc = jnp.dot(wbf_ref[...], feats_ref[...],
                  preferred_element_type=jnp.float32)              # (C, T)
    acc = acc + jnp.dot(yrest_ref[...], uT_ref[...],
                        preferred_element_type=jnp.float32)        # (C, T)
    # Size-1 stage (all-ones upsample column) + bias: VPU broadcast add.
    acc = acc + bb_ref[...] + y1_ref[...]                          # (C, 1) bcast
    out_ref[...] = jnp.maximum(acc, 0.0).astype(out_ref.dtype)


# ----------------------------------------------------------------------------
# Wrapper.
# ----------------------------------------------------------------------------
def _pick_hw_tile(HW: int, target: int = 512) -> int:
    if HW % 128 != 0:
        return HW                                   # single full-extent block
    t = max(128, (min(target, HW) // 128) * 128)
    while HW % t:
        t -= 128
    return t


@functools.partial(jax.jit, static_argnames=("hw_tile",))
def pyramid_pooling_module(x, stage_w, stage_b, wb, bb, hw_tile=None):
    N, C, H, W = x.shape
    HW = H * W
    Cm = stage_w[0].shape[0]

    T = _pick_hw_tile(HW) if hw_tile is None else hw_tile
    assert HW % T == 0
    n_t = HW // T

    # Channels-first, flattened, bf16 inputs to the MXU (f32 accumulation).
    feats = x.reshape(N, C, HW).astype(jnp.bfloat16)
    pT, uT = _build_stacked_spatial_mats(H, W)

    wc_all = jnp.stack(stage_w).astype(jnp.bfloat16)               # (4, Cm, C)
    bc_all = jnp.stack(stage_b).astype(jnp.float32)                # (4, Cm, 1)
    # Pre-split bottleneck weight (concat order in forward: stages..., feats).
    wbs_all = jnp.stack(
        [wb[:, i * Cm:(i + 1) * Cm] for i in range(len(SIZES))]
    ).astype(jnp.bfloat16)                                         # (4, C, Cm)
    wbf = wb[:, len(SIZES) * Cm:].astype(jnp.bfloat16)             # (C, C)
    bb_f = bb.astype(jnp.float32)                                  # (C, 1)

    # Constant operands: same block every grid step.
    # NOTE: on v7x these could additionally be single-buffered
    # (pipeline_mode=pl.Buffered(1)) and vmem_limit_bytes raised for larger HW
    # tiles; omitted here to keep compilation maximally portable.
    def const(a):
        return pl.BlockSpec(a.shape, lambda n, h, _nd=a.ndim: (0,) * _nd)

    # ---- phase 1: pooled reduction + stage convs -> y1, y_rest -------------
    y1, y_rest = pl.pallas_call(
        _pool_stage_kernel,
        out_shape=(jax.ShapeDtypeStruct((N, C, 1), jnp.float32),
                   jax.ShapeDtypeStruct((N, C, _N_REST), jnp.bfloat16)),
        grid=(N, n_t),
        in_specs=[pl.BlockSpec((None, C, T), lambda n, h: (n, 0, h)),
                  pl.BlockSpec((T, _N_SQ), lambda n, h: (h, 0)),
                  const(wc_all), const(bc_all), const(wbs_all)],
        out_specs=(pl.BlockSpec((None, C, 1), lambda n, h: (n, 0, 0)),
                   pl.BlockSpec((None, C, _N_REST), lambda n, h: (n, 0, 0))),
        scratch_shapes=[pltpu.VMEM((C, _N_SQ), jnp.float32)],
        compiler_params=pltpu.CompilerParams(
            dimension_semantics=("parallel", "arbitrary")),
    )(feats, pT, wc_all, bc_all, wbs_all)

    # ---- phase 2: HW-tiled apply (fully parallel grid) ----------------------
    out = pl.pallas_call(
        _apply_kernel,
        out_shape=jax.ShapeDtypeStruct((N, C, HW), jnp.float32),
        grid=(N, n_t),
        in_specs=[pl.BlockSpec((None, C, T), lambda n, h: (n, 0, h)),
                  pl.BlockSpec((_N_REST, T), lambda n, h: (0, h)),
                  pl.BlockSpec((None, C, 1), lambda n, h: (n, 0, 0)),
                  pl.BlockSpec((None, C, _N_REST), lambda n, h: (n, 0, 0)),
                  const(wbf), const(bb_f)],
        out_specs=pl.BlockSpec((None, C, T), lambda n, h: (n, 0, h)),
        compiler_params=pltpu.CompilerParams(
            dimension_semantics=("parallel", "parallel")),
    )(feats, uT, y1, y_rest, wbf, bb_f)

    return out.reshape(N, C, H, W)


# ----------------------------------------------------------------------------
# Deterministic synthetic parameters (channels-first conv weight layout).
# ----------------------------------------------------------------------------
def init_params(key, in_channels, channels):
    keys = jax.random.split(key, 2 * len(SIZES) + 2)
    stage_w, stage_b = [], []
    for i in range(len(SIZES)):
        # torch Conv2d(features, out_features, 1) weight -> (C_mid, C_in)
        stage_w.append(0.1 * jax.random.normal(keys[2 * i],
                                               (channels, in_channels),
                                               jnp.float32))
        stage_b.append(0.1 * jax.random.normal(keys[2 * i + 1],
                                               (channels, 1), jnp.float32))
    c_tot = in_channels + len(SIZES) * channels
    wb = 0.1 * jax.random.normal(keys[-2], (in_channels, c_tot), jnp.float32)
    bb = 0.1 * jax.random.normal(keys[-1], (in_channels, 1), jnp.float32)
    return stage_w, stage_b, wb, bb


# ----------------------------------------------------------------------------
# Pure-JAX f32 reference (mirrors the PyTorch forward: concat then bottleneck).
# ----------------------------------------------------------------------------
def reference_forward(x, stage_w, stage_b, wb, bb):
    N, C, H, W = x.shape
    HW = H * W
    feats = x.reshape(N, C, HW)
    hi = lax.Precision.HIGHEST
    priors = []
    for s, wc, bc in zip(SIZES, stage_w, stage_b):
        P = jnp.asarray(np.kron(_adaptive_pool_matrix(H, s),
                                _adaptive_pool_matrix(W, s)))      # (s*s, HW)
        U = jnp.asarray(np.kron(_bilinear_matrix(H, s),
                                _bilinear_matrix(W, s)))           # (HW, s*s)
        pooled = jnp.einsum('nch,ph->ncp', feats, P, precision=hi)
        z = jax.nn.relu(jnp.einsum('mc,ncp->nmp', wc, pooled, precision=hi) + bc)
        priors.append(jnp.einsum('hp,nmp->nmh', U, z, precision=hi))
    cat = jnp.concatenate(priors + [feats], axis=1)    # == torch.cat(priors, 1)
    out = jax.nn.relu(jnp.einsum('oc,nch->noh', wb, cat, precision=hi) + bb)
    return out.reshape(N, C, H, W)


if __name__ == "__main__":
    N, C_IN, C_MID, H, W = 2, 8, 16, 16, 16

    key = jax.random.PRNGKey(0)
    k_x, k_p = jax.random.split(key)
    x = jax.random.normal(k_x, (N, C_IN, H, W), jnp.float32)
    stage_w, stage_b, wb, bb = init_params(k_p, C_IN, C_MID)

    # hw_tile=128 -> 2 HW tiles, exercising the tiled reduction + apply paths.
    out = pyramid_pooling_module(x, stage_w, stage_b, wb, bb, hw_tile=128)
    out = jax.block_until_ready(out)

    ref = reference_forward(x, stage_w, stage_b, wb, bb)
    assert out.shape == (N, C_IN, H, W), out.shape
    # bf16 operands with f32 accumulation vs f32 HIGHEST reference.
    np.testing.assert_allclose(np.asarray(out), np.asarray(ref),
                               rtol=2e-2, atol=2e-2)
    print("KERNEL_OK")
</pallas_src>

<mosaic_0001>
module attributes {stable_mosaic.version = 11 : i64} {
  func.func @_apply_kernel(%arg0: i32, %arg1: i32, %arg2: memref<1x8x128xbf16, #tpu.memory_space<vmem>>, %arg3: memref<49x128xbf16, #tpu.memory_space<vmem>>, %arg4: memref<1x8x1xf32, #tpu.memory_space<vmem>>, %arg5: memref<1x8x49xbf16, #tpu.memory_space<vmem>>, %arg6: memref<8x8xbf16, #tpu.memory_space<vmem>>, %arg7: memref<8x1xf32, #tpu.memory_space<vmem>>, %arg8: memref<1x8x128xf32, #tpu.memory_space<vmem>>) attributes {dimension_semantics = [#tpu.dimension_semantics<parallel>, #tpu.dimension_semantics<parallel>], iteration_bounds = array<i64: 2, 2>, scalar_prefetch = 0 : i64, scratch_operands = 0 : i64, tpu.core_type = #tpu.core_type<tc>, window_params = [{transform_indices = @transform_0, window_bounds = array<i64: 1, 8, 128>}, {transform_indices = @transform_1, window_bounds = array<i64: 49, 128>}, {transform_indices = @transform_2, window_bounds = array<i64: 1, 8, 1>}, {transform_indices = @transform_3, window_bounds = array<i64: 1, 8, 49>}, {pipeline_mode = #tpu.pipeline_mode<synchronous>, transform_indices = @transform_4, window_bounds = array<i64: 8, 8>}, {pipeline_mode = #tpu.pipeline_mode<synchronous>, transform_indices = @transform_5, window_bounds = array<i64: 8, 1>}, {transform_indices = @transform_6, window_bounds = array<i64: 1, 8, 128>}]} {
    %c0 = arith.constant 0 : index
    %c0_0 = arith.constant 0 : index
    %0 = vector.load %arg6[%c0, %c0_0] : memref<8x8xbf16, #tpu.memory_space<vmem>>, vector<8x8xbf16>
    %c0_1 = arith.constant 0 : index
    %c0_2 = arith.constant 0 : index
    %c0_3 = arith.constant 0 : index
    %1 = vector.load %arg2[%c0_1, %c0_2, %c0_3] : memref<1x8x128xbf16, #tpu.memory_space<vmem>>, vector<1x8x128xbf16>
    %2 = vector.shape_cast %1 : vector<1x8x128xbf16> to vector<8x128xbf16>
    %cst = arith.constant dense<0.000000e+00> : vector<8x128xf32>
    %3 = tpu.matmul %0, %2, %cst {dimension_numbers = #tpu.dot_dimension_numbers<[1], [0], [0], [1], [0, 0, 1, 1], [], []>} : vector<8x8xbf16>, vector<8x128xbf16>, vector<8x128xf32> -> vector<8x128xf32>
    %c0_4 = arith.constant 0 : index
    %c0_5 = arith.constant 0 : index
    %c0_6 = arith.constant 0 : index
    %4 = vector.load %arg5[%c0_4, %c0_5, %c0_6] : memref<1x8x49xbf16, #tpu.memory_space<vmem>>, vector<1x8x49xbf16>
    %5 = vector.shape_cast %4 : vector<1x8x49xbf16> to vector<8x49xbf16>
    %c0_7 = arith.constant 0 : index
    %c0_8 = arith.constant 0 : index
    %6 = vector.load %arg3[%c0_7, %c0_8] : memref<49x128xbf16, #tpu.memory_space<vmem>>, vector<49x128xbf16>
    %cst_9 = arith.constant dense<0.000000e+00> : vector<8x128xf32>
    %7 = tpu.matmul %5, %6, %cst_9 {dimension_numbers = #tpu.dot_dimension_numbers<[1], [0], [0], [1], [0, 0, 1, 1], [], []>} : vector<8x49xbf16>, vector<49x128xbf16>, vector<8x128xf32> -> vector<8x128xf32>
    %8 = arith.addf %3, %7 : vector<8x128xf32>
    %c0_10 = arith.constant 0 : index
    %c0_11 = arith.constant 0 : index
    %9 = vector.load %arg7[%c0_10, %c0_11] : memref<8x1xf32, #tpu.memory_space<vmem>>, vector<8x1xf32>
    %10 = vector.broadcast %9 : vector<8x1xf32> to vector<8x128xf32>
    %11 = arith.addf %8, %10 : vector<8x128xf32>
    %c0_12 = arith.constant 0 : index
    %c0_13 = arith.constant 0 : index
    %c0_14 = arith.constant 0 : index
    %12 = vector.load %arg4[%c0_12, %c0_13, %c0_14] : memref<1x8x1xf32, #tpu.memory_space<vmem>>, vector<1x8x1xf32>
    %13 = vector.shape_cast %12 : vector<1x8x1xf32> to vector<8x1xf32>
    %14 = vector.broadcast %13 : vector<8x1xf32> to vector<8x128xf32>
    %15 = arith.addf %11, %14 : vector<8x128xf32>
    %cst_15 = arith.constant 0.000000e+00 : f32
    %16 = vector.broadcast %cst_15 : f32 to vector<8x128xf32>
    %17 = arith.maximumf %15, %16 : vector<8x128xf32>
    %c0_16 = arith.constant 0 : index
    %c0_17 = arith.constant 0 : index
    %c0_18 = arith.constant 0 : index
    %18 = vector.load %arg8[%c0_16, %c0_17, %c0_18] : memref<1x8x128xf32, #tpu.memory_space<vmem>>, vector<1x8x128xf32>
    %19 = vector.shape_cast %18 : vector<1x8x128xf32> to vector<8x128xf32>
    %20 = vector.shape_cast %17 : vector<8x128xf32> to vector<1x8x128xf32>
    tpu.vector_store %arg8[%c0_16, %c0_17, %c0_18], %20 {strides = array<i32>} : memref<1x8x128xf32, #tpu.memory_space<vmem>>, vector<1x8x128xf32>,
    return
  }
  func.func @transform_0(%arg0: i32, %arg1: i32) -> (i32, i32, i32) {
    %c0_i32 = arith.constant 0 : i32
    %c0_i32_0 = arith.constant 0 : i32
    return %arg0, %c0_i32, %arg1 : i32, i32, i32
  }
  func.func @transform_1(%arg0: i32, %arg1: i32) -> (i32, i32) {
    %c0_i32 = arith.constant 0 : i32
    %c0_i32_0 = arith.constant 0 : i32
    return %c0_i32, %arg1 : i32, i32
  }
  func.func @transform_2(%arg0: i32, %arg1: i32) -> (i32, i32, i32) {
    %c0_i32 = arith.constant 0 : i32
    %c0_i32_0 = arith.constant 0 : i32
    %c0_i32_1 = arith.constant 0 : i32
    return %arg0, %c0_i32, %c0_i32_0 : i32, i32, i32
  }
  func.func @transform_3(%arg0: i32, %arg1: i32) -> (i32, i32, i32) {
    %c0_i32 = arith.constant 0 : i32
    %c0_i32_0 = arith.constant 0 : i32
    %c0_i32_1 = arith.constant 0 : i32
    return %arg0, %c0_i32, %c0_i32_0 : i32, i32, i32
  }
  func.func @transform_4(%arg0: i32, %arg1: i32) -> (i32, i32) {
    %c0_i32 = arith.constant 0 : i32
    %c0_i32_0 = arith.constant 0 : i32
    %c0_i32_1 = arith.constant 0 : i32
    return %c0_i32, %c0_i32_0 : i32, i32
  }
  func.func @transform_5(%arg0: i32, %arg1: i32) -> (i32, i32) {
    %c0_i32 = arith.constant 0 : i32
    %c0_i32_0 = arith.constant 0 : i32
    %c0_i32_1 = arith.constant 0 : i32
    return %c0_i32, %c0_i32_0 : i32, i32
  }
  func.func @transform_6(%arg0: i32, %arg1: i32) -> (i32, i32, i32) {
    %c0_i32 = arith.constant 0 : i32
    %c0_i32_0 = arith.constant 0 : i32
    return %arg0, %c0_i32, %arg1 : i32, i32, i32
  }
}

module attributes {stable_mosaic.version = 11 : i64} {
  func.func @_pool_stage_kernel(%arg0: i32, %arg1: i32, %arg2: memref<1x8x128xbf16, #tpu.memory_space<vmem>>, %arg3: memref<128x50xbf16, #tpu.memory_space<vmem>>, %arg4: memref<4x16x8xbf16, #tpu.memory_space<vmem>>, %arg5: memref<4x16x1xf32, #tpu.memory_space<vmem>>, %arg6: memref<4x8x16xbf16, #tpu.memory_space<vmem>>, %arg7: memref<1x8x1xf32, #tpu.memory_space<vmem>>, %arg8: memref<1x8x49xbf16, #tpu.memory_space<vmem>>, %arg9: memref<8x50xf32, #tpu.memory_space<vmem>>) attributes {dimension_semantics = [#tpu.dimension_semantics<parallel>, #tpu.dimension_semantics<arbitrary>], iteration_bounds = array<i64: 2, 2>, scalar_prefetch = 0 : i64, scratch_operands = 1 : i64, tpu.core_type = #tpu.core_type<tc>, window_params = [{transform_indices = @transform_0, window_bounds = array<i64: 1, 8, 128>}, {transform_indices = @transform_1, window_bounds = array<i64: 128, 50>}, {pipeline_mode = #tpu.pipeline_mode<synchronous>, transform_indices = @transform_2, window_bounds = array<i64: 4, 16, 8>}, {pipeline_mode = #tpu.pipeline_mode<synchronous>, transform_indices = @transform_3, window_bounds = array<i64: 4, 16, 1>}, {pipeline_mode = #tpu.pipeline_mode<synchronous>, transform_indices = @transform_4, window_bounds = array<i64: 4, 8, 16>}, {transform_indices = @transform_5, window_bounds = array<i64: 1, 8, 1>}, {transform_indices = @transform_6, window_bounds = array<i64: 1, 8, 49>}]} {
    %c0_i32 = arith.constant 0 : i32
    %0 = arith.cmpi eq, %arg1, %c0_i32 : i32
    %1 = arith.extui %0 : i1 to i32
    %c0_i32_0 = arith.constant 0 : i32
    %2 = arith.cmpi ne, %1, %c0_i32_0 : i32
    scf.if %2 {
      %cst_10 = arith.constant 0.000000e+00 : f32
      %13 = vector.broadcast %cst_10 : f32 to vector<8x50xf32>
      %c0_11 = arith.constant 0 : index
      %c0_12 = arith.constant 0 : index
      %14 = vector.load %arg9[%c0_11, %c0_12] : memref<8x50xf32, #tpu.memory_space<vmem>>, vector<8x50xf32>
      tpu.vector_store %arg9[%c0_11, %c0_12], %13 {strides = array<i32>} : memref<8x50xf32, #tpu.memory_space<vmem>>, vector<8x50xf32>,
    } else {
    }
    %c0 = arith.constant 0 : index
    %c0_1 = arith.constant 0 : index
    %3 = vector.load %arg9[%c0, %c0_1] : memref<8x50xf32, #tpu.memory_space<vmem>>, vector<8x50xf32>
    %c0_2 = arith.constant 0 : index
    %c0_3 = arith.constant 0 : index
    %c0_4 = arith.constant 0 : index
    %4 = vector.load %arg2[%c0_2, %c0_3, %c0_4] : memref<1x8x128xbf16, #tpu.memory_space<vmem>>, vector<1x8x128xbf16>
    %5 = vector.shape_cast %4 : vector<1x8x128xbf16> to vector<8x128xbf16>
    %c0_5 = arith.constant 0 : index
    %c0_6 = arith.constant 0 : index
    %6 = vector.load %arg3[%c0_5, %c0_6] : memref<128x50xbf16, #tpu.memory_space<vmem>>, vector<128x50xbf16>
    %cst = arith.constant dense<0.000000e+00> : vector<8x50xf32>
    %7 = tpu.matmul %5, %6, %cst {dimension_numbers = #tpu.dot_dimension_numbers<[1], [0], [0], [1], [0, 0, 1, 1], [], []>} : vector<8x128xbf16>, vector<128x50xbf16>, vector<8x50xf32> -> vector<8x50xf32>
    %8 = arith.addf %3, %7 : vector<8x50xf32>
    %c0_7 = arith.constant 0 : index
    %c0_8 = arith.constant 0 : index
    %9 = vector.load %arg9[%c0_7, %c0_8] : memref<8x50xf32, #tpu.memory_space<vmem>>, vector<8x50xf32>
    tpu.vector_store %arg9[%c0_7, %c0_8], %8 {strides = array<i32>} : memref<8x50xf32, #tpu.memory_space<vmem>>, vector<8x50xf32>,
    %c1_i32 = arith.constant 1 : i32
    %10 = arith.cmpi eq, %arg1, %c1_i32 : i32
    %11 = arith.extui %10 : i1 to i32
    %c0_i32_9 = arith.constant 0 : i32
    %12 = arith.cmpi ne, %11, %c0_i32_9 : i32
    scf.if %12 {
      %c0_10 = arith.constant 0 : index
      %c0_11 = arith.constant 0 : index
      %13 = vector.load %arg9[%c0_10, %c0_11] : memref<8x50xf32, #tpu.memory_space<vmem>>, vector<8x50xf32>
      %14 = arith.truncf %13 : vector<8x50xf32> to vector<8x50xbf16>
      %15 = vector.extract_strided_slice %14 {offsets = [0, 0], sizes = [8, 1], strides = [1, 1]} : vector<8x50xbf16> to vector<8x1xbf16>
      %c0_12 = arith.constant 0 : index
      %c0_13 = arith.constant 0 : index
      %c0_14 = arith.constant 0 : index
      %16 = vector.load %arg4[%c0_12, %c0_13, %c0_14] : memref<4x16x8xbf16, #tpu.memory_space<vmem>>, vector<1x16x8xbf16>
      %17 = vector.shape_cast %16 : vector<1x16x8xbf16> to vector<16x8xbf16>
      %cst_15 = arith.constant dense<0.000000e+00> : vector<16x1xf32>
      %18 = tpu.matmul %17, %15, %cst_15 {dimension_numbers = #tpu.dot_dimension_numbers<[1], [0], [0], [1], [0, 0, 1, 1], [], []>} : vector<16x8xbf16>, vector<8x1xbf16>, vector<16x1xf32> -> vector<16x1xf32>
      %c0_16 = arith.constant 0 : index
      %c0_17 = arith.constant 0 : index
      %c0_18 = arith.constant 0 : index
      %19 = vector.load %arg5[%c0_16, %c0_17, %c0_18] : memref<4x16x1xf32, #tpu.memory_space<vmem>>, vector<1x16x1xf32>
      %20 = vector.shape_cast %19 : vector<1x16x1xf32> to vector<16x1xf32>
      %21 = arith.addf %18, %20 : vector<16x1xf32>
      %cst_19 = arith.constant 0.000000e+00 : f32
      %22 = vector.broadcast %cst_19 : f32 to vector<16x1xf32>
      %23 = arith.maximumf %21, %22 : vector<16x1xf32>
      %24 = arith.truncf %23 : vector<16x1xf32> to vector<16x1xbf16>
      %c0_20 = arith.constant 0 : index
      %c0_21 = arith.constant 0 : index
      %c0_22 = arith.constant 0 : index
      %25 = vector.load %arg6[%c0_20, %c0_21, %c0_22] : memref<4x8x16xbf16, #tpu.memory_space<vmem>>, vector<1x8x16xbf16>
      %26 = vector.shape_cast %25 : vector<1x8x16xbf16> to vector<8x16xbf16>
      %cst_23 = arith.constant dense<0.000000e+00> : vector<8x1xf32>
      %27 = tpu.matmul %26, %24, %cst_23 {dimension_numbers = #tpu.dot_dimension_numbers<[1], [0], [0], [1], [0, 0, 1, 1], [], []>} : vector<8x16xbf16>, vector<16x1xbf16>, vector<8x1xf32> -> vector<8x1xf32>
      %28 = vector.extract_strided_slice %14 {offsets = [0, 1], sizes = [8, 4], strides = [1, 1]} : vector<8x50xbf16> to vector<8x4xbf16>
      %c1 = arith.constant 1 : index
      %c0_24 = arith.constant 0 : index
      %c0_25 = arith.constant 0 : index
      %29 = vector.load %arg4[%c1, %c0_24, %c0_25] : memref<4x16x8xbf16, #tpu.memory_space<vmem>>, vector<1x16x8xbf16>
      %30 = vector.shape_cast %29 : vector<1x16x8xbf16> to vector<16x8xbf16>
      %cst_26 = arith.constant dense<0.000000e+00> : vector<16x4xf32>
      %31 = tpu.matmul %30, %28, %cst_26 {dimension_numbers = #tpu.dot_dimension_numbers<[1], [0], [0], [1], [0, 0, 1, 1], [], []>} : vector<16x8xbf16>, vector<8x4xbf16>, vector<16x4xf32> -> vector<16x4xf32>
      %c1_27 = arith.constant 1 : index
      %c0_28 = arith.constant 0 : index
      %c0_29 = arith.constant 0 : index
      %32 = vector.load %arg5[%c1_27, %c0_28, %c0_29] : memref<4x16x1xf32, #tpu.memory_space<vmem>>, vector<1x16x1xf32>
      %33 = vector.shape_cast %32 : vector<1x16x1xf32> to vector<16x1xf32>
      %34 = vector.broadcast %33 : vector<16x1xf32> to vector<16x4xf32>
      %35 = arith.addf %31, %34 : vector<16x4xf32>
      %cst_30 = arith.constant 0.000000e+00 : f32
      %36 = vector.broadcast %cst_30 : f32 to vector<16x4xf32>
      %37 = arith.maximumf %35, %36 : vector<16x4xf32>
      %38 = arith.truncf %37 : vector<16x4xf32> to vector<16x4xbf16>
      %c1_31 = arith.constant 1 : index
      %c0_32 = arith.constant 0 : index
      %c0_33 = arith.constant 0 : index
      %39 = vector.load %arg6[%c1_31, %c0_32, %c0_33] : memref<4x8x16xbf16, #tpu.memory_space<vmem>>, vector<1x8x16xbf16>
      %40 = vector.shape_cast %39 : vector<1x8x16xbf16> to vector<8x16xbf16>
      %cst_34 = arith.constant dense<0.000000e+00> : vector<8x4xf32>
      %41 = tpu.matmul %40, %38, %cst_34 {dimension_numbers = #tpu.dot_dimension_numbers<[1], [0], [0], [1], [0, 0, 1, 1], [], []>} : vector<8x16xbf16>, vector<16x4xbf16>, vector<8x4xf32> -> vector<8x4xf32>
      %42 = vector.extract_strided_slice %14 {offsets = [0, 5], sizes = [8, 9], strides = [1, 1]} : vector<8x50xbf16> to vector<8x9xbf16>
      %c2 = arith.constant 2 : index
      %c0_35 = arith.constant 0 : index
      %c0_36 = arith.constant 0 : index
      %43 = vector.load %arg4[%c2, %c0_35, %c0_36] : memref<4x16x8xbf16, #tpu.memory_space<vmem>>, vector<1x16x8xbf16>
      %44 = vector.shape_cast %43 : vector<1x16x8xbf16> to vector<16x8xbf16>
      %cst_37 = arith.constant dense<0.000000e+00> : vector<16x9xf32>
      %45 = tpu.matmul %44, %42, %cst_37 {dimension_numbers = #tpu.dot_dimension_numbers<[1], [0], [0], [1], [0, 0, 1, 1], [], []>} : vector<16x8xbf16>, vector<8x9xbf16>, vector<16x9xf32> -> vector<16x9xf32>
      %c2_38 = arith.constant 2 : index
      %c0_39 = arith.constant 0 : index
      %c0_40 = arith.constant 0 : index
      %46 = vector.load %arg5[%c2_38, %c0_39, %c0_40] : memref<4x16x1xf32, #tpu.memory_space<vmem>>, vector<1x16x1xf32>
      %47 = vector.shape_cast %46 : vector<1x16x1xf32> to vector<16x1xf32>
      %48 = vector.broadcast %47 : vector<16x1xf32> to vector<16x9xf32>
      %49 = arith.addf %45, %48 : vector<16x9xf32>
      %cst_41 = arith.constant 0.000000e+00 : f32
      %50 = vector.broadcast %cst_41 : f32 to vector<16x9xf32>
      %51 = arith.maximumf %49, %50 : vector<16x9xf32>
      %52 = arith.truncf %51 : vector<16x9xf32> to vector<16x9xbf16>
      %c2_42 = arith.constant 2 : index
      %c0_43 = arith.constant 0 : index
      %c0_44 = arith.constant 0 : index
      %53 = vector.load %arg6[%c2_42, %c0_43, %c0_44] : memref<4x8x16xbf16, #tpu.memory_space<vmem>>, vector<1x8x16xbf16>
      %54 = vector.shape_cast %53 : vector<1x8x16xbf16> to vector<8x16xbf16>
      %cst_45 = arith.constant dense<0.000000e+00> : vector<8x9xf32>
      %55 = tpu.matmul %54, %52, %cst_45 {dimension_numbers = #tpu.dot_dimension_numbers<[1], [0], [0], [1], [0, 0, 1, 1], [], []>} : vector<8x16xbf16>, vector<16x9xbf16>, vector<8x9xf32> -> vector<8x9xf32>
      %56 = vector.extract_strided_slice %14 {offsets = [0, 14], sizes = [8, 36], strides = [1, 1]} : vector<8x50xbf16> to vector<8x36xbf16>
      %c3 = arith.constant 3 : index
      %c0_46 = arith.constant 0 : index
      %c0_47 = arith.constant 0 : index
      %57 = vector.load %arg4[%c3, %c0_46, %c0_47] : memref<4x16x8xbf16, #tpu.memory_space<vmem>>, vector<1x16x8xbf16>
      %58 = vector.shape_cast %57 : vector<1x16x8xbf16> to vector<16x8xbf16>
      %cst_48 = arith.constant dense<0.000000e+00> : vector<16x36xf32>
      %59 = tpu.matmul %58, %56, %cst_48 {dimension_numbers = #tpu.dot_dimension_numbers<[1], [0], [0], [1], [0, 0, 1, 1], [], []>} : vector<16x8xbf16>, vector<8x36xbf16>, vector<16x36xf32> -> vector<16x36xf32>
      %c3_49 = arith.constant 3 : index
      %c0_50 = arith.constant 0 : index
      %c0_51 = arith.constant 0 : index
      %60 = vector.load %arg5[%c3_49, %c0_50, %c0_51] : memref<4x16x1xf32, #tpu.memory_space<vmem>>, vector<1x16x1xf32>
      %61 = vector.shape_cast %60 : vector<1x16x1xf32> to vector<16x1xf32>
      %62 = vector.broadcast %61 : vector<16x1xf32> to vector<16x36xf32>
      %63 = arith.addf %59, %62 : vector<16x36xf32>
      %cst_52 = arith.constant 0.000000e+00 : f32
      %64 = vector.broadcast %cst_52 : f32 to vector<16x36xf32>
      %65 = arith.maximumf %63, %64 : vector<16x36xf32>
      %66 = arith.truncf %65 : vector<16x36xf32> to vector<16x36xbf16>
      %c3_53 = arith.constant 3 : index
      %c0_54 = arith.constant 0 : index
      %c0_55 = arith.constant 0 : index
      %67 = vector.load %arg6[%c3_53, %c0_54, %c0_55] : memref<4x8x16xbf16, #tpu.memory_space<vmem>>, vector<1x8x16xbf16>
      %68 = vector.shape_cast %67 : vector<1x8x16xbf16> to vector<8x16xbf16>
      %cst_56 = arith.constant dense<0.000000e+00> : vector<8x36xf32>
      %69 = tpu.matmul %68, %66, %cst_56 {dimension_numbers = #tpu.dot_dimension_numbers<[1], [0], [0], [1], [0, 0, 1, 1], [], []>} : vector<8x16xbf16>, vector<16x36xbf16>, vector<8x36xf32> -> vector<8x36xf32>
      %c0_57 = arith.constant 0 : index
      %c0_58 = arith.constant 0 : index
      %c0_59 = arith.constant 0 : index
      %70 = vector.load %arg7[%c0_57, %c0_58, %c0_59] : memref<1x8x1xf32, #tpu.memory_space<vmem>>, vector<1x8x1xf32>
      %71 = vector.shape_cast %70 : vector<1x8x1xf32> to vector<8x1xf32>
      %72 = vector.shape_cast %27 : vector<8x1xf32> to vector<1x8x1xf32>
      tpu.vector_store %arg7[%c0_57, %c0_58, %c0_59], %72 {strides = array<i32>} : memref<1x8x1xf32, #tpu.memory_space<vmem>>, vector<1x8x1xf32>,
      %73 = tpu.concatenate %41, %55, %69 in 1 : vector<8x4xf32>, vector<8x9xf32>, vector<8x36xf32> -> vector<8x49xf32>
      %74 = arith.truncf %73 : vector<8x49xf32> to vector<8x49xbf16>
      %c0_60 = arith.constant 0 : index
      %c0_61 = arith.constant 0 : index
      %c0_62 = arith.constant 0 : index
      %75 = vector.load %arg8[%c0_60, %c0_61, %c0_62] : memref<1x8x49xbf16, #tpu.memory_space<vmem>>, vector<1x8x49xbf16>
      %76 = vector.shape_cast %75 : vector<1x8x49xbf16> to vector<8x49xbf16>
      %77 = vector.shape_cast %74 : vector<8x49xbf16> to vector<1x8x49xbf16>
      tpu.vector_store %arg8[%c0_60, %c0_61, %c0_62], %77 {strides = array<i32>} : memref<1x8x49xbf16, #tpu.memory_space<vmem>>, vector<1x8x49xbf16>,
    } else {
    }
    return
  }
  func.func @transform_0(%arg0: i32, %arg1: i32) -> (i32, i32, i32) {
    %c0_i32 = arith.constant 0 : i32
    %c0_i32_0 = arith.constant 0 : i32
    return %arg0, %c0_i32, %arg1 : i32, i32, i32
  }
  func.func @transform_1(%arg0: i32, %arg1: i32) -> (i32, i32) {
    %c0_i32 = arith.constant 0 : i32
    %c0_i32_0 = arith.constant 0 : i32
    return %arg1, %c0_i32 : i32, i32
  }
  func.func @transform_2(%arg0: i32, %arg1: i32) -> (i32, i32, i32) {
    %c0_i32 = arith.constant 0 : i32
    %c0_i32_0 = arith.constant 0 : i32
    %c0_i32_1 = arith.constant 0 : i32
    %c0_i32_2 = arith.constant 0 : i32
    return %c0_i32, %c0_i32_0, %c0_i32_1 : i32, i32, i32
  }
  func.func @transform_3(%arg0: i32, %arg1: i32) -> (i32, i32, i32) {
    %c0_i32 = arith.constant 0 : i32
    %c0_i32_0 = arith.constant 0 : i32
    %c0_i32_1 = arith.constant 0 : i32
    %c0_i32_2 = arith.constant 0 : i32
    return %c0_i32, %c0_i32_0, %c0_i32_1 : i32, i32, i32
  }
  func.func @transform_4(%arg0: i32, %arg1: i32) -> (i32, i32, i32) {
    %c0_i32 = arith.constant 0 : i32
    %c0_i32_0 = arith.constant 0 : i32
    %c0_i32_1 = arith.constant 0 : i32
    %c0_i32_2 = arith.constant 0 : i32
    return %c0_i32, %c0_i32_0, %c0_i32_1 : i32, i32, i32
  }
  func.func @transform_5(%arg0: i32, %arg1: i32) -> (i32, i32, i32) {
    %c0_i32 = arith.constant 0 : i32
    %c0_i32_0 = arith.constant 0 : i32
    %c0_i32_1 = arith.constant 0 : i32
    return %arg0, %c0_i32, %c0_i32_0 : i32, i32, i32
  }
  func.func @transform_6(%arg0: i32, %arg1: i32) -> (i32, i32, i32) {
    %c0_i32 = arith.constant 0 : i32
    %c0_i32_0 = arith.constant 0 : i32
    %c0_i32_1 = arith.constant 0 : i32
    return %arg0, %c0_i32, %c0_i32_0 : i32, i32, i32
  }
}

</mosaic_0001>

<llo_original>
// kernel: pyramid_pooling_module.3
$region0: #{pyramid_pooling_module.3}
  #allocation0 [shape = 'u32[]', space=smem, size = 0x4, offset = 0x4, fixed_abs, tag = 'smem constant byte address 0x4 - core index']
  #allocation1 [shape = 'u32[144,128]{1,0:T(1,128)}', space=vmem, size = 0x12000, scoped, tag = 'internal scratch']
  %s0 = inlined_call_operand.vmem [shape: bf16[2,8,256], index: 0, kind: input, shape index: {}]
  %s1 = inlined_call_operand.vmem [shape: bf16[49,256], index: 1, kind: input, shape index: {}]
  %s2 = inlined_call_operand.vmem [shape: f32[2,8,1], index: 2, kind: input, shape index: {}]
  %s3 = inlined_call_operand.vmem [shape: bf16[2,8,49], index: 3, kind: input, shape index: {}]
  %s4 = inlined_call_operand.vmem [shape: bf16[8,8], index: 4, kind: input, shape index: {}]
  %s5 = inlined_call_operand.vmem [shape: f32[8,1], index: 5, kind: input, shape index: {}]
  %s6 = inlined_call_operand.vmem [shape: f32[2,8,256], index: 6, kind: output, shape index: {}]
  %s7 = sld [smem:[#allocation0]]
  $region98: #{pyramid_pooling_module.3} parent=0
    _
  %s9 = ssub.s32 1, %s7
  %s10 = scalar_select 0, %s9, %s7
  $region1: #{pyramid_pooling_module.3} parent=0
    #allocation2 [shape = 'u8[28672]{0}', space=vmem, size = 0x7000, scoped, tag = 'input window, operand 1']
    loop: start=0, step=1, limit=6
    $region2: #{pyramid_pooling_module.3} parent=1 // loop_pre_header
      _
    $region3: #{pyramid_pooling_module.3} parent=1 // loop_header
      %s12 = sphi 0, %s16
      %p13 = scmp.ge.s32.totalorder %s12, 6
      %s19 = sphi 0, %s31
      %s20 = sphi 0, %s27
      %s21 = sphi 0, %s19
      %s22 = sphi 0, %s20
      %s23 = sphi 0, %s21
      %s24 = sphi 0, %s22
      %s36 = sphi 0, %s38
      %s39 = sphi 0, %s36
      %s40 = sphi 0, %s39
      %s56 = sphi 0, %s40
      %s62 = sphi 0, %s64
      %s65 = sphi 0, %s62
      %s66 = sphi 0, %s65
      %s82 = sphi 0, %s66
      %s88 = sphi 0, %s90
      %s91 = sphi 0, %s88
      %s92 = sphi 0, %s91
      %s108 = sphi 0, %s92
      %s114 = sphi 0, %s116
      %s117 = sphi 0, %s114
      %s118 = sphi 0, %s117
      %s134 = sphi 0, %s118
      %s138 = sphi 0, %s138
      %s140 = sphi 0, %s138
      %s141 = sphi 0, %s140
      %s155 = sphi 0, %s141
      %s159 = sphi 0, %s159
      %s161 = sphi 0, %s159
      %s162 = sphi 0, %s161
      %s176 = sphi 0, %s162
      %s184 = sphi 0, %s186
      %s187 = sphi 0, %s184
      %s188 = sphi 0, %s187
      %s204 = sphi 0, %s188
    $region4: #{pyramid_pooling_module.3} parent=1 // loop_header_branch
      %15 = sbr.rel (%p13) target = $region8
    $region5: #{pyramid_pooling_module.3} parent=1 // loop_body
      %s17 = ssub.s32 %s12, 1
      %s18 = ssub.s32 %s12, 2
      %s25 = sadd.s32 1, %s20
      %p26 = scmp.ge.s32.totalorder %s25, 2
      %s27 = scalar_select %p26, 0, %s25
      %s28 = sadd.s32 1, %s19
      %s29 = scalar_select %p26, %s28, %s19
      %p30 = scmp.ge.s32.totalorder %s29, 2
      %s31 = scalar_select %p30, 0, %s29
      %s32 = ssub.s32 %s19, %s31
      %s33 = ssub.s32 %s20, %s27
      %s34 = sor.u32 %s32, %s33
      %p35 = scmp.eq.s32.totalorder %s34, 0
      %s37 = sadd.s32 %s36, 1
      %s38 = scalar_select %p35, %s36, %s37
      %p41 = pneg %p35
      %p42 = scmp.eq.s32.totalorder %s12, 3
      %p43 = por %p41, %p42
      %p44 = scmp.ne.s32.totalorder %s36, %s39
      %p45 = scmp.eq.s32.totalorder %s12, 0
      %p46 = por %p44, %p45
      %p47 = scmp.ne.s32.totalorder %s36, %s39
      %p48 = scmp.eq.s32.totalorder %s17, 3
      %p49 = por %p47, %p48
      %p50 = scmp.ne.s32.totalorder %s39, %s40
      %p51 = scmp.eq.s32.totalorder %s17, 0
      %p52 = por %p50, %p51
      %p53 = scmp.ne.s32.totalorder %s39, %s40
      %p54 = scmp.eq.s32.totalorder %s18, 3
      %p55 = por %p53, %p54
      %p57 = scmp.ne.s32.totalorder %s40, %s56
      %p58 = scmp.eq.s32.totalorder %s18, 0
      %p59 = por %p57, %p58
      %s60 = ssub.s32 %s20, %s27
      %p61 = scmp.eq.s32.totalorder %s60, 0
      %s63 = sadd.s32 %s62, 1
      %s64 = scalar_select %p61, %s62, %s63
      %p67 = pneg %p61
      %p68 = scmp.eq.s32.totalorder %s12, 3
      %p69 = por %p67, %p68
      %p70 = scmp.ne.s32.totalorder %s62, %s65
      %p71 = scmp.eq.s32.totalorder %s12, 0
      %p72 = por %p70, %p71
      %p73 = scmp.ne.s32.totalorder %s62, %s65
      %p74 = scmp.eq.s32.totalorder %s17, 3
      %p75 = por %p73, %p74
      %p76 = scmp.ne.s32.totalorder %s65, %s66
      %p77 = scmp.eq.s32.totalorder %s17, 0
      %p78 = por %p76, %p77
      %p79 = scmp.ne.s32.totalorder %s65, %s66
      %p80 = scmp.eq.s32.totalorder %s18, 3
      %p81 = por %p79, %p80
      %p83 = scmp.ne.s32.totalorder %s66, %s82
      %p84 = scmp.eq.s32.totalorder %s18, 0
      %p85 = por %p83, %p84
      %s86 = ssub.s32 %s19, %s31
      %p87 = scmp.eq.s32.totalorder %s86, 0
      %s89 = sadd.s32 %s88, 1
      %s90 = scalar_select %p87, %s88, %s89
      %p93 = pneg %p87
      %p94 = scmp.eq.s32.totalorder %s12, 3
      %p95 = por %p93, %p94
      %p96 = scmp.ne.s32.totalorder %s88, %s91
      %p97 = scmp.eq.s32.totalorder %s12, 0
      %p98 = por %p96, %p97
      %p99 = scmp.ne.s32.totalorder %s88, %s91
      %p100 = scmp.eq.s32.totalorder %s17, 3
      %p101 = por %p99, %p100
      %p102 = scmp.ne.s32.totalorder %s91, %s92
      %p103 = scmp.eq.s32.totalorder %s17, 0
      %p104 = por %p102, %p103
      %p105 = scmp.ne.s32.totalorder %s91, %s92
      %p106 = scmp.eq.s32.totalorder %s18, 3
      %p107 = por %p105, %p106
      %p109 = scmp.ne.s32.totalorder %s92, %s108
      %p110 = scmp.eq.s32.totalorder %s18, 0
      %p111 = por %p109, %p110
      %s112 = ssub.s32 %s19, %s31
      %p113 = scmp.eq.s32.totalorder %s112, 0
      %s115 = sadd.s32 %s114, 1
      %s116 = scalar_select %p113, %s114, %s115
      %p119 = pneg %p113
      %p120 = scmp.eq.s32.totalorder %s12, 3
      %p121 = por %p119, %p120
      %p122 = scmp.ne.s32.totalorder %s114, %s117
      %p123 = scmp.eq.s32.totalorder %s12, 0
      %p124 = por %p122, %p123
      %p125 = scmp.ne.s32.totalorder %s114, %s117
      %p126 = scmp.eq.s32.totalorder %s17, 3
      %p127 = por %p125, %p126
      %p128 = scmp.ne.s32.totalorder %s117, %s118
      %p129 = scmp.eq.s32.totalorder %s17, 0
      %p130 = por %p128, %p129
      %p131 = scmp.ne.s32.totalorder %s117, %s118
      %p132 = scmp.eq.s32.totalorder %s18, 3
      %p133 = por %p131, %p132
      %p135 = scmp.ne.s32.totalorder %s118, %s134
      %p136 = scmp.eq.s32.totalorder %s18, 0
      %p137 = por %p135, %p136
      %s139 = sadd.s32 %s138, 1
      %p142 = scmp.eq.s32.totalorder %s12, 3
      %p143 = scmp.ne.s32.totalorder %s138, %s140
      %p144 = scmp.eq.s32.totalorder %s12, 0
      %p145 = por %p143, %p144
      %p146 = scmp.ne.s32.totalorder %s138, %s140
      %p147 = scmp.eq.s32.totalorder %s17, 3
      %p148 = por %p146, %p147
      %p149 = scmp.ne.s32.totalorder %s140, %s141
      %p150 = scmp.eq.s32.totalorder %s17, 0
      %p151 = por %p149, %p150
      %p152 = scmp.ne.s32.totalorder %s140, %s141
      %p153 = scmp.eq.s32.totalorder %s18, 3
      %p154 = por %p152, %p153
      %p156 = scmp.ne.s32.totalorder %s141, %s155
      %p157 = scmp.eq.s32.totalorder %s18, 0
      %p158 = por %p156, %p157
      %s160 = sadd.s32 %s159, 1
      %p163 = scmp.eq.s32.totalorder %s12, 3
      %p164 = scmp.ne.s32.totalorder %s159, %s161
      %p165 = scmp.eq.s32.totalorder %s12, 0
      %p166 = por %p164, %p165
      %p167 = scmp.ne.s32.totalorder %s159, %s161
      %p168 = scmp.eq.s32.totalorder %s17, 3
      %p169 = por %p167, %p168
      %p170 = scmp.ne.s32.totalorder %s161, %s162
      %p171 = scmp.eq.s32.totalorder %s17, 0
      %p172 = por %p170, %p171
      %p173 = scmp.ne.s32.totalorder %s161, %s162
      %p174 = scmp.eq.s32.totalorder %s18, 3
      %p175 = por %p173, %p174
      %p177 = scmp.ne.s32.totalorder %s162, %s176
      %p178 = scmp.eq.s32.totalorder %s18, 0
      %p179 = por %p177, %p178
      %s180 = ssub.s32 %s19, %s31
      %s181 = ssub.s32 %s20, %s27
      %s182 = sor.u32 %s180, %s181
      %p183 = scmp.eq.s32.totalorder %s182, 0
      %s185 = sadd.s32 %s184, 1
      %s186 = scalar_select %p183, %s184, %s185
      %p189 = pneg %p183
      %p190 = scmp.eq.s32.totalorder %s12, 3
      %p191 = por %p189, %p190
      %p192 = scmp.ne.s32.totalorder %s184, %s187
      %p193 = scmp.eq.s32.totalorder %s12, 0
      %p194 = por %p192, %p193
      %p195 = scmp.ne.s32.totalorder %s184, %s187
      %p196 = scmp.eq.s32.totalorder %s17, 3
      %p197 = por %p195, %p196
      %p198 = scmp.ne.s32.totalorder %s187, %s188
      %p199 = scmp.eq.s32.totalorder %s17, 0
      %p200 = por %p198, %p199
      %p201 = scmp.ne.s32.totalorder %s187, %s188
      %p202 = scmp.eq.s32.totalorder %s18, 3
      %p203 = por %p201, %p202
      %p205 = scmp.ne.s32.totalorder %s188, %s204
      %p206 = scmp.eq.s32.totalorder %s18, 0
      %p207 = por %p205, %p206
      %p208 = scmp.le.s32.totalorder 1, %s12
      %p209 = scmp.lt.s32.totalorder %s12, 5
      %p210 = pnand %p208, %p209
      %p211 = pneg %p210
      // Predicated region
      $region9: #{pyramid_pooling_module.3} parent=5 // pred_check
        _
      $region10: #{pyramid_pooling_module.3} parent=5 // pred_check_branch
        %213 = sbr.rel (%p210) target = $region12
      $region11: #{pyramid_pooling_module.3} parent=5 // pred_region
        %s214 = ssub.s32 %s12, 1
        // Predicated region
        $region13: #{pyramid_pooling_module.3} parent=11 // pred_check
          %p215 = pneg %p151
        $region14: #{pyramid_pooling_module.3} parent=11 // pred_check_branch
          %217 = sbr.rel (%p215) target = $region16
        $region15: #{pyramid_pooling_module.3} parent=11 // pred_region
          _
        $region16: #{pyramid_pooling_module.3} parent=11 // pred_fallthru
          _
        // Predicated region
        $region17: #{pyramid_pooling_module.3} parent=11 // pred_check
          %p218 = pneg %p172
        $region18: #{pyramid_pooling_module.3} parent=11 // pred_check_branch
          %220 = sbr.rel (%p218) target = $region20
        $region19: #{pyramid_pooling_module.3} parent=11 // pred_region
          _
        $region20: #{pyramid_pooling_module.3} parent=11 // pred_fallthru
          _
      $region12: #{pyramid_pooling_module.3} parent=5 // pred_fallthru
        _
      %p221 = scmp.lt.s32.totalorder %s12, 4
      // Predicated region
      $region21: #{pyramid_pooling_module.3} parent=5 // pred_check
        %p222 = pneg %p221
      $region22: #{pyramid_pooling_module.3} parent=5 // pred_check_branch
        %224 = sbr.rel (%p222) target = $region24
      $region23: #{pyramid_pooling_module.3} parent=5 // pred_region
        // Predicated region
        $region25: #{pyramid_pooling_module.3} parent=23 // pred_check
          %p225 = pneg %p46
        $region26: #{pyramid_pooling_module.3} parent=23 // pred_check_branch
          %227 = sbr.rel (%p225) target = $region28
        $region27: #{pyramid_pooling_module.3} parent=23 // pred_region
          %p228 = scmp.lt.s32.totalorder %s19, 1
          %s229 = scalar_select %p228, %s19, 1
          %p230 = scmp.lt.s32.totalorder %s20, 1
          %s231 = scalar_select %p230, %s20, 1
          %s232 = smul.addr %s229, 2
          %s233 = sadd.s32 %s231, %s232
          %s234 = smul.addr %s233, 4
          %s235 = scalar_lea.vmem %s0, %s234
        $region28: #{pyramid_pooling_module.3} parent=23 // pred_fallthru
          _
        // Predicated region
        $region29: #{pyramid_pooling_module.3} parent=23 // pred_check
          %p236 = pneg %p72
        $region30: #{pyramid_pooling_module.3} parent=23 // pred_check_branch
          %238 = sbr.rel (%p236) target = $region32
        $region31: #{pyramid_pooling_module.3} parent=23 // pred_region
          %s239 = sand.u32 %s62, 1
          %s240 = sand.u32 %s62, 1
          %s241 = smul.addr %s240, 28
          %s242 = scalar_lea.vmem [#allocation2], %s241
          %s243 = smul.addr %s20, 4
          %s244 = scalar_lea.vmem %s1, %s243
          // Predicated region
          $region33: #{pyramid_pooling_module.3} parent=31 // pred_check
            _
          $region34: #{pyramid_pooling_module.3} parent=31 // pred_check_branch
            %246 = sbr.rel (0) target = $region36
          $region35: #{pyramid_pooling_module.3} parent=31 // pred_region
            // Predicated region
            $region37: #{pyramid_pooling_module.3} parent=35 // pred_check
              _
            $region38: #{pyramid_pooling_module.3} parent=35 // pred_check_branch
              %248 = sbr.rel target = $region40
            $region39: #{pyramid_pooling_module.3} parent=35 // pred_region
              // Predicated region
              $region52: #{pyramid_pooling_module.3} parent=39 // pred_check
                _
              $region53: #{pyramid_pooling_module.3} parent=39 // pred_check_branch
                %276 = sbr.rel (0) target = $region55
              $region54: #{pyramid_pooling_module.3} parent=39 // pred_region
                loop: start=0, step=1, limit=1
                $region56: #{pyramid_pooling_module.3} parent=54 // loop_pre_header
                  _
                $region57: #{pyramid_pooling_module.3} parent=54 // loop_header
                  %s278 = sphi 0, %s282
                  %p279 = scmp.ge.s32.totalorder %s278, 1
                  %s283 = sphi %s244, %s244
                  %s284 = sphi %s242, %s242
                $region58: #{pyramid_pooling_module.3} parent=54 // loop_header_branch
                  %281 = sbr.rel (%p279) target = $region62
                $region59: #{pyramid_pooling_module.3} parent=54 // loop_body
                  _
                $region60: #{pyramid_pooling_module.3} parent=54 // loop_footer
                  %s282 = sadd.s32 1, %s278
                $region61: #{pyramid_pooling_module.3} parent=54 // loop_footer_branch
                  %277 = sbr.rel target = $region57
                $region62: #{pyramid_pooling_module.3} parent=54 // loop_exit
                  _
                %s286 = ssub.s32 16, 1
                loop: start=0, step=1, limit=1
                $region63: #{pyramid_pooling_module.3} parent=54 // loop_pre_header
                  _
                $region64: #{pyramid_pooling_module.3} parent=54 // loop_header
                  %s288 = sphi 0, %s292
                  %p289 = scmp.ge.s32.totalorder %s288, 1
                  %s293 = sphi %s244, %s244
                  %s294 = sphi %s242, %s242
                $region65: #{pyramid_pooling_module.3} parent=54 // loop_header_branch
                  %291 = sbr.rel (%p289) target = $region69
                $region66: #{pyramid_pooling_module.3} parent=54 // loop_body
                  %v295 = vld [vmem:[%s293] sm:%s286]
                  %296 = vst [vmem:[%s294] sm:%s286] %v295
                  %v297 = vld [vmem:[%s293 + $0x8] sm:%s286]
                  %298 = vst [vmem:[%s294 + $0x4] sm:%s286] %v297
                  %v299 = vld [vmem:[%s293 + $0x10] sm:%s286]
                  %300 = vst [vmem:[%s294 + $0x8] sm:%s286] %v299
                  %v301 = vld [vmem:[%s293 + $0x18] sm:%s286]
                  %302 = vst [vmem:[%s294 + $0xc] sm:%s286] %v301
                  %v303 = vld [vmem:[%s293 + $0x20] sm:%s286]
                  %304 = vst [vmem:[%s294 + $0x10] sm:%s286] %v303
                  %v305 = vld [vmem:[%s293 + $0x28] sm:%s286]
                  %306 = vst [vmem:[%s294 + $0x14] sm:%s286] %v305
                  %v307 = vld [vmem:[%s293 + $0x30] sm:%s286]
                  %308 = vst [vmem:[%s294 + $0x18] sm:%s286] %v307
                $region67: #{pyramid_pooling_module.3} parent=54 // loop_footer
                  %s292 = sadd.s32 1, %s288
                $region68: #{pyramid_pooling_module.3} parent=54 // loop_footer_branch
                  %287 = sbr.rel target = $region64
                $region69: #{pyramid_pooling_module.3} parent=54 // loop_exit
                  _
              $region55: #{pyramid_pooling_module.3} parent=39 // pred_fallthru
                _
            $region40: #{pyramid_pooling_module.3} parent=35 // pred_fallthru
              _
            // Predicated region
            $region41: #{pyramid_pooling_module.3} parent=35 // pred_check
              _
            $region42: #{pyramid_pooling_module.3} parent=35 // pred_check_branch
              %250 = sbr.rel (0) target = $region44
            $region43: #{pyramid_pooling_module.3} parent=35 // pred_region
              %s252 = ssub.s32 16, 1
              loop: start=0, step=1, limit=1
              $region45: #{pyramid_pooling_module.3} parent=43 // loop_pre_header
                _
              $region46: #{pyramid_pooling_module.3} parent=43 // loop_header
                %s254 = sphi 0, %s258
                %p255 = scmp.ge.s32.totalorder %s254, 1
                %s259 = sphi %s244, %s244
                %s260 = sphi %s242, %s242
              $region47: #{pyramid_pooling_module.3} parent=43 // loop_header_branch
                %257 = sbr.rel (%p255) target = $region51
              $region48: #{pyramid_pooling_module.3} parent=43 // loop_body
                %v261 = vld [vmem:[%s259] sm:%s252]
                %262 = vst [vmem:[%s260] sm:%s252] %v261
                %v263 = vld [vmem:[%s259 + $0x8] sm:%s252]
                %264 = vst [vmem:[%s260 + $0x4] sm:%s252] %v263
                %v265 = vld [vmem:[%s259 + $0x10] sm:%s252]
                %266 = vst [vmem:[%s260 + $0x8] sm:%s252] %v265
                %v267 = vld [vmem:[%s259 + $0x18] sm:%s252]
                %268 = vst [vmem:[%s260 + $0xc] sm:%s252] %v267
                %v269 = vld [vmem:[%s259 + $0x20] sm:%s252]
                %270 = vst [vmem:[%s260 + $0x10] sm:%s252] %v269
                %v271 = vld [vmem:[%s259 + $0x28] sm:%s252]
                %272 = vst [vmem:[%s260 + $0x14] sm:%s252] %v271
                %v273 = vld [vmem:[%s259 + $0x30] sm:%s252]
                %274 = vst [vmem:[%s260 + $0x18] sm:%s252] %v273
              $region49: #{pyramid_pooling_module.3} parent=43 // loop_footer
                %s258 = sadd.s32 1, %s254
              $region50: #{pyramid_pooling_module.3} parent=43 // loop_footer_branch
                %253 = sbr.rel target = $region46
              $region51: #{pyramid_pooling_module.3} parent=43 // loop_exit
                _
            $region44: #{pyramid_pooling_module.3} parent=35 // pred_fallthru
              _
          $region36: #{pyramid_pooling_module.3} parent=31 // pred_fallthru
            _
          %309 = vnop
        $region32: #{pyramid_pooling_module.3} parent=23 // pred_fallthru
          _
        // Predicated region
        $region70: #{pyramid_pooling_module.3} parent=23 // pred_check
          %p310 = pneg %p98
        $region71: #{pyramid_pooling_module.3} parent=23 // pred_check_branch
          %312 = sbr.rel (%p310) target = $region73
        $region72: #{pyramid_pooling_module.3} parent=23 // pred_region
          %p313 = scmp.lt.s32.totalorder %s19, 1
          %s314 = scalar_select %p313, %s19, 1
          %s315 = smul.addr %s314, 8
          %s316 = scalar_lea.vmem %s2, %s315
        $region73: #{pyramid_pooling_module.3} parent=23 // pred_fallthru
          _
        // Predicated region
        $region74: #{pyramid_pooling_module.3} parent=23 // pred_check
          %p317 = pneg %p124
        $region75: #{pyramid_pooling_module.3} parent=23 // pred_check_branch
          %319 = sbr.rel (%p317) target = $region77
        $region76: #{pyramid_pooling_module.3} parent=23 // pred_region
          %p320 = scmp.lt.s32.totalorder %s19, 1
          %s321 = scalar_select %p320, %s19, 1
          %s322 = smul.addr %s321, 4
          %s323 = scalar_lea.vmem %s3, %s322
        $region77: #{pyramid_pooling_module.3} parent=23 // pred_fallthru
          _
      $region24: #{pyramid_pooling_module.3} parent=5 // pred_fallthru
        _
      %p324 = scmp.le.s32.totalorder 1, %s12
      %p325 = scmp.lt.s32.totalorder %s12, 5
      %p326 = pnand %p324, %p325
      %p327 = pneg %p326
      // Predicated region
      $region78: #{pyramid_pooling_module.3} parent=5 // pred_check
        _
      $region79: #{pyramid_pooling_module.3} parent=5 // pred_check_branch
        %329 = sbr.rel (%p326) target = $region81
      $region80: #{pyramid_pooling_module.3} parent=5 // pred_region
        %s330 = ssub.s32 %s12, 1
        %s331 = sand.u32 %s65, 1
        %s332 = sand.u32 %s65, 1
        %s333 = smul.addr %s332, 28
        %s334 = scalar_lea.vmem [#allocation2], %s333
        // Predicated region
        $region82: #{pyramid_pooling_module.3} parent=80 // pred_check
          %p335 = pneg %p78
        $region83: #{pyramid_pooling_module.3} parent=80 // pred_check_branch
          %337 = sbr.rel (%p335) target = $region85
        $region84: #{pyramid_pooling_module.3} parent=80 // pred_region
          _
        $region85: #{pyramid_pooling_module.3} parent=80 // pred_fallthru
          _
        %p338 = scmp.lt.s32.totalorder %s21, 1
        %s339 = scalar_select %p338, %s21, 1
        %p340 = scmp.lt.s32.totalorder %s22, 1
        %s341 = scalar_select %p340, %s22, 1
        %s342 = smul.addr %s339, 2
        %s343 = sadd.s32 %s341, %s342
        %s344 = smul.addr %s343, 4
        %s345 = scalar_lea.vmem %s0, %s344
        %p346 = pneg %p52
        %p347 = pneg %p49
        %s348 = sand.u32 %s65, 1
        %s349 = sand.u32 %s65, 1
        %s350 = smul.addr %s349, 28
        %s351 = scalar_lea.vmem [#allocation2], %s350
        %p352 = pneg %p78
        %p353 = pneg %p75
        %p354 = scmp.lt.s32.totalorder %s21, 1
        %s355 = scalar_select %p354, %s21, 1
        %s356 = smul.addr %s355, 8
        %s357 = scalar_lea.vmem %s2, %s356
        %p358 = pneg %p104
        %p359 = pneg %p101
        %p360 = scmp.lt.s32.totalorder %s21, 1
        %s361 = scalar_select %p360, %s21, 1
        %s362 = smul.addr %s361, 4
        %s363 = scalar_lea.vmem %s3, %s362
        %p364 = pneg %p130
        %p365 = pneg %p127
        %p366 = pneg %p151
        %p367 = pneg %p148
        %p368 = pneg %p172
        %p369 = pneg %p169
        %p370 = pneg %p200
        %p371 = pneg %p197
        %p372 = scmp.lt.s32.totalorder %s21, 1
        %s373 = scalar_select %p372, %s21, 1
        %p374 = scmp.lt.s32.totalorder %s22, 1
        %s375 = scalar_select %p374, %s22, 1
        %s376 = smul.addr %s373, 2
        %s377 = sadd.s32 %s375, %s376
        %s378 = smul.addr %s377, 8
        %s379 = scalar_lea.vmem %s6, %s378
        %p380 = scmp.lt.s32.totalorder %s21, 1
        %s381 = scalar_select %p380, %s21, 1
        %p382 = scmp.lt.s32.totalorder %s22, 1
        %s383 = scalar_select %p382, %s22, 1
        %s384 = smul.addr %s381, 2
        %s385 = sadd.s32 %s383, %s384
        %s386 = smul.addr %s385, 4
        %s387 = scalar_lea.vmem %s0, %s386
        %p388 = scmp.lt.s32.totalorder %s21, 1
        %s389 = scalar_select %p388, %s21, 1
        %s390 = smul.addr %s389, 8
        %s391 = scalar_lea.vmem %s2, %s390
        %p392 = scmp.lt.s32.totalorder %s21, 1
        %s393 = scalar_select %p392, %s21, 1
        %s394 = smul.addr %s393, 4
        %s395 = scalar_lea.vmem %s3, %s394
        %p396 = scmp.lt.s32.totalorder %s21, 1
        %s397 = scalar_select %p396, %s21, 1
        %p398 = scmp.lt.s32.totalorder %s22, 1
        %s399 = scalar_select %p398, %s22, 1
        %s400 = smul.addr %s397, 2
        %s401 = sadd.s32 %s399, %s400
        %s402 = smul.addr %s401, 8
        %s403 = scalar_lea.vmem %s6, %s402
        %v405 = vld [vmem:[%s4] sm:$0xf]
        %v406 = vld [vmem:[%s387] sm:$0xf]
        %v407 = vld [vmem:[%s395] sm:$0xf]
        %v408 = vld [vmem:[%s334] sm:$0xf]
        %v409 = vld [vmem:[%s334 + $0x4] sm:$0xf]
        %v410 = vld [vmem:[%s334 + $0x8] sm:$0xf]
        %v411 = vld [vmem:[%s334 + $0xc] sm:$0xf]
        %v412 = vld [vmem:[%s334 + $0x10] sm:$0xf]
        %v413 = vld [vmem:[%s334 + $0x14] sm:$0xf]
        %v414 = vld [vmem:[%s334 + $0x18] sm:$0x1]
        %v422 = vunpack.c.l.b16 %v408
        %v423 = vunpack.c.l.b16 %v409
        %v424 = vunpack.c.l.b16 %v410
        %v425 = vunpack.c.l.b16 %v411
        %v426 = vunpack.c.l.b16 %v412
        %v427 = vunpack.c.l.b16 %v413
        %v428 = vunpack.c.l.b16 %v414
        %v429 = vpack.c.b16 %v423, %v422
        %v430 = vpack.c.b16 %v425, %v424
        %v431 = vpack.c.b16 %v427, %v426
        %v432 = vpack.c.b16 %v428, %v428
        %vm436 = vcmask 400384
        %v438 = vsel %vm436, %v407, 0
        %vm440 = vcmask 1040384
        %v441 = vsel 0, 4294967295, 65535
        %v442 = vsel %vm440, %v441, 0
        %v444 = vand.u32 %v432, %v442
        %446 = vmatprep.subr.bf16.mxu0 0
        %447 = vmatpush1.bf16.msra.mxu0 0
        %448 = vmatprep.subr.bf16.mxu0 0
        %449 = vmatpush1.bf16.msra.mxu0 0
        %450 = vmatprep.subr.bf16.mxu0 0
        %451 = vmatpush1.bf16.msra.mxu0 0
        %452 = vmatprep.subr.bf16.mxu0 0
        %453 = vmatpush1.bf16.msra.mxu0 0
        %454 = vmatprep.subr.bf16.mxu0 0
        %455 = vmatpush1.bf16.msra.mxu0 %v444
        %456 = vmatprep.subr.bf16.mxu0 0
        %457 = vmatpush1.bf16.msra.mxu0 %v431
        %458 = vmatprep.subr.bf16.mxu0 0
        %459 = vmatpush1.bf16.msra.mxu0 %v430
        %460 = vmatprep.subr.bf16.mxu0 0
        %461 = vmatpush1.bf16.msra.mxu0 %v429
        %462 = vmatprep.subr.bf16.mxu0 0
        %463 = vmatpush2.bf16.msra.mxu0 0
        %464 = vmatprep.subr.bf16.mxu0 0
        %465 = vmatpush2.bf16.msra.mxu0 0
        %466 = vmatprep.subr.bf16.mxu0 0
        %467 = vmatpush2.bf16.msra.mxu0 0
        %468 = vmatprep.subr.bf16.mxu0 0
        %469 = vmatpush2.bf16.msra.mxu0 0
        %470 = vmatprep.subr.bf16.mxu0 0
        %471 = vmatpush2.bf16.msra.mxu0 0
        %472 = vmatprep.subr.bf16.mxu0 0
        %473 = vmatpush2.bf16.msra.mxu0 0
        %474 = vmatprep.subr.bf16.mxu0 0
        %475 = vmatpush2.bf16.msra.mxu0 0
        %476 = vmatprep.subr.bf16.mxu0 0
        %477 = vmatpush2.bf16.msra.mxu0 0
        %478 = vmatprep.mubr.bf16.mxu0 0
        %479 = vmatmul.mubr.bf16.gmra.mxu0 %v438
        %v480 = vpop.f32.mrf.mxu0
        %v481 = vadd.f32 0.0, %v480
        %v482 = vpop.f32.mrf.mxu0
        %v483 = vpop.f32.mrf.mxu0
        %v484 = vpop.f32.mrf.mxu0
        %485 = vdwg.mxu0
        %vm486 = vcmask 64512
        %v488 = vsel %vm486, %v405, 0
        %vm490 = vcmask 1043456
        %v492 = vsel %vm490, %v406, 0
        %494 = vmatprep.subr.bf16.mxu0 0
        %495 = vmatpush1.bf16.msra.mxu0 0
        %496 = vmatprep.subr.bf16.mxu0 0
        %497 = vmatpush1.bf16.msra.mxu0 0
        %498 = vmatprep.subr.bf16.mxu0 0
        %499 = vmatpush1.bf16.msra.mxu0 0
        %500 = vmatprep.subr.bf16.mxu0 0
        %501 = vmatpush1.bf16.msra.mxu0 0
        %502 = vmatprep.subr.bf16.mxu0 0
        %503 = vmatpush1.bf16.msra.mxu0 0
        %504 = vmatprep.subr.bf16.mxu0 0
        %505 = vmatpush1.bf16.msra.mxu0 0
        %506 = vmatprep.subr.bf16.mxu0 0
        %507 = vmatpush1.bf16.msra.mxu0 0
        %508 = vmatprep.subr.bf16.mxu0 0
        %509 = vmatpush1.bf16.msra.mxu0 %v492
        %510 = vmatprep.subr.bf16.mxu0 0
        %511 = vmatpush2.bf16.msra.mxu0 0
        %512 = vmatprep.subr.bf16.mxu0 0
        %513 = vmatpush2.bf16.msra.mxu0 0
        %514 = vmatprep.subr.bf16.mxu0 0
        %515 = vmatpush2.bf16.msra.mxu0 0
        %516 = vmatprep.subr.bf16.mxu0 0
        %517 = vmatpush2.bf16.msra.mxu0 0
        %518 = vmatprep.subr.bf16.mxu0 0
        %519 = vmatpush2.bf16.msra.mxu0 0
        %520 = vmatprep.subr.bf16.mxu0 0
        %521 = vmatpush2.bf16.msra.mxu0 0
        %522 = vmatprep.subr.bf16.mxu0 0
        %523 = vmatpush2.bf16.msra.mxu0 0
        %524 = vmatprep.subr.bf16.mxu0 0
        %525 = vmatpush2.bf16.msra.mxu0 0
        %526 = vmatprep.mubr.bf16.mxu0 0
        %527 = vmatmul.mubr.bf16.gmra.mxu0 %v488
        %v528 = vpop.f32.mrf.mxu0
        %v529 = vadd.f32 %v481, %v528
        %v530 = vpop.f32.mrf.mxu0
        %v531 = vpop.f32.mrf.mxu0
        %v532 = vpop.f32.mrf.mxu0
        %533 = vdwg.mxu0
        %v534 = vld [vmem:[%s5] sm:$0xff]
        %536 = vset.pattern.permute.xlu0 0
        %537 = vperm.xlu0 %536, %v534
        %v538 = vpop.permute.xlu0 %537
        %v540 = vadd.f32 %v529, %v538
        %v541 = vld [vmem:[%s391] sm:$0xff]
        %543 = vset.pattern.permute.xlu0 0
        %544 = vperm.xlu0 %543, %v541
        %v545 = vpop.permute.xlu0 %544
        %v547 = vadd.f32 %v540, %v545
        %v548 = vmax.f32 %v547, 0.0
        %549 = vst [vmem:[%s403] sm:$0xff] %v548
        %p550 = scmp.lt.s32.totalorder %s21, 1
        %s551 = scalar_select %p550, %s21, 1
        %p552 = scmp.lt.s32.totalorder %s22, 1
        %s553 = scalar_select %p552, %s22, 1
        %s554 = smul.addr %s551, 2
        %s555 = sadd.s32 %s553, %s554
        %s556 = smul.addr %s555, 8
        %s557 = scalar_lea.vmem %s6, %s556
        // Predicated region
        $region86: #{pyramid_pooling_module.3} parent=80 // pred_check
          %p558 = pneg %p197
        $region87: #{pyramid_pooling_module.3} parent=80 // pred_check_branch
          %560 = sbr.rel (%p558) target = $region89
        $region88: #{pyramid_pooling_module.3} parent=80 // pred_region
          _
        $region89: #{pyramid_pooling_module.3} parent=80 // pred_fallthru
          _
      $region81: #{pyramid_pooling_module.3} parent=5 // pred_fallthru
        _
      %p561 = scmp.le.s32.totalorder 2, %s12
      // Predicated region
      $region90: #{pyramid_pooling_module.3} parent=5 // pred_check
        %p562 = pneg %p561
      $region91: #{pyramid_pooling_module.3} parent=5 // pred_check_branch
        %564 = sbr.rel (%p562) target = $region93
      $region92: #{pyramid_pooling_module.3} parent=5 // pred_region
        %s565 = ssub.s32 %s12, 2
        // Predicated region
        $region94: #{pyramid_pooling_module.3} parent=92 // pred_check
          %p566 = pneg %p203
        $region95: #{pyramid_pooling_module.3} parent=92 // pred_check_branch
          %568 = sbr.rel (%p566) target = $region97
        $region96: #{pyramid_pooling_module.3} parent=92 // pred_region
          %p569 = scmp.lt.s32.totalorder %s23, 1
          %s570 = scalar_select %p569, %s23, 1
          %p571 = scmp.lt.s32.totalorder %s24, 1
          %s572 = scalar_select %p571, %s24, 1
          %s573 = smul.addr %s570, 2
          %s574 = sadd.s32 %s572, %s573
          %s575 = smul.addr %s574, 8
          %s576 = scalar_lea.vmem %s6, %s575
        $region97: #{pyramid_pooling_module.3} parent=92 // pred_fallthru
          _
      $region93: #{pyramid_pooling_module.3} parent=5 // pred_fallthru
        _
    $region6: #{pyramid_pooling_module.3} parent=1 // loop_footer
      %s16 = sadd.s32 1, %s12
    $region7: #{pyramid_pooling_module.3} parent=1 // loop_footer_branch
      %11 = sbr.rel target = $region3
    $region8: #{pyramid_pooling_module.3} parent=1 // loop_exit
      _

// kernel: pyramid_pooling_module.2
$region0: #{pyramid_pooling_module.2}
  #allocation0 [shape = 'u32[]', space=smem, size = 0x4, offset = 0x4, fixed_abs, tag = 'smem constant byte address 0x4 - core index']
  #allocation1 [shape = 'u32[144,128]{1,0:T(1,128)}', space=vmem, size = 0x12000, scoped, tag = 'internal scratch']
  #allocation2 [shape = 'f32[8,50]{1,0:T(8,128)}', space=vmem, size = 0x1000, scoped, tag = 'scratch operand']
  %s0 = inlined_call_operand.vmem [shape: bf16[2,8,256], index: 0, kind: input, shape index: {}]
  %s1 = inlined_call_operand.vmem [shape: bf16[256,50], index: 1, kind: input, shape index: {}]
  %s2 = inlined_call_operand.vmem [shape: bf16[4,16,8], index: 2, kind: input, shape index: {}]
  %s3 = inlined_call_operand.vmem [shape: f32[4,16,1], index: 3, kind: input, shape index: {}]
  %s4 = inlined_call_operand.vmem [shape: bf16[4,8,16], index: 4, kind: input, shape index: {}]
  %s5 = inlined_call_operand.vmem [shape: f32[2,8,1], index: 5, kind: output, shape index: {0}]
  %s6 = inlined_call_operand.vmem [shape: bf16[2,8,49], index: 6, kind: output, shape index: {1}]
  %7 = xla_tuple %s5, %s6
  %s8 = sld [smem:[#allocation0]]
  $region69: #{pyramid_pooling_module.2} parent=0
    _
  %s10 = ssub.s32 1, %s8
  %s11 = scalar_select 0, %s10, %s8
  loop: start=0, step=1, limit=6
  $region2: #{pyramid_pooling_module.2} parent=0 // loop_pre_header
    _
  $region3: #{pyramid_pooling_module.2} parent=0 // loop_header
    %s13 = sphi 0, %s17
    %p14 = scmp.ge.s32.totalorder %s13, 6
    %s20 = sphi 0, %s32
    %s21 = sphi 0, %s28
    %s22 = sphi 0, %s20
    %s23 = sphi 0, %s21
    %s24 = sphi 0, %s22
    %s25 = sphi 0, %s23
    %s37 = sphi 0, %s39
    %s40 = sphi 0, %s37
    %s41 = sphi 0, %s40
    %s57 = sphi 0, %s41
    %s63 = sphi 0, %s65
    %s66 = sphi 0, %s63
    %s67 = sphi 0, %s66
    %s83 = sphi 0, %s67
    %s87 = sphi 0, %s87
    %s89 = sphi 0, %s87
    %s90 = sphi 0, %s89
    %s104 = sphi 0, %s90
    %s108 = sphi 0, %s108
    %s110 = sphi 0, %s108
    %s111 = sphi 0, %s110
    %s125 = sphi 0, %s111
    %s129 = sphi 0, %s129
    %s131 = sphi 0, %s129
    %s132 = sphi 0, %s131
    %s146 = sphi 0, %s132
    %s152 = sphi 0, %s154
    %s155 = sphi 0, %s152
    %s156 = sphi 0, %s155
    %s172 = sphi 0, %s156
    %s178 = sphi 0, %s180
    %s181 = sphi 0, %s178
    %s182 = sphi 0, %s181
    %s198 = sphi 0, %s182
  $region4: #{pyramid_pooling_module.2} parent=0 // loop_header_branch
    %16 = sbr.rel (%p14) target = $region8
  $region5: #{pyramid_pooling_module.2} parent=0 // loop_body
    %s18 = ssub.s32 %s13, 1
    %s19 = ssub.s32 %s13, 2
    %s26 = sadd.s32 1, %s21
    %p27 = scmp.ge.s32.totalorder %s26, 2
    %s28 = scalar_select %p27, 0, %s26
    %s29 = sadd.s32 1, %s20
    %s30 = scalar_select %p27, %s29, %s20
    %p31 = scmp.ge.s32.totalorder %s30, 2
    %s32 = scalar_select %p31, 0, %s30
    %s33 = ssub.s32 %s20, %s32
    %s34 = ssub.s32 %s21, %s28
    %s35 = sor.u32 %s33, %s34
    %p36 = scmp.eq.s32.totalorder %s35, 0
    %s38 = sadd.s32 %s37, 1
    %s39 = scalar_select %p36, %s37, %s38
    %p42 = pneg %p36
    %p43 = scmp.eq.s32.totalorder %s13, 3
    %p44 = por %p42, %p43
    %p45 = scmp.ne.s32.totalorder %s37, %s40
    %p46 = scmp.eq.s32.totalorder %s13, 0
    %p47 = por %p45, %p46
    %p48 = scmp.ne.s32.totalorder %s37, %s40
    %p49 = scmp.eq.s32.totalorder %s18, 3
    %p50 = por %p48, %p49
    %p51 = scmp.ne.s32.totalorder %s40, %s41
    %p52 = scmp.eq.s32.totalorder %s18, 0
    %p53 = por %p51, %p52
    %p54 = scmp.ne.s32.totalorder %s40, %s41
    %p55 = scmp.eq.s32.totalorder %s19, 3
    %p56 = por %p54, %p55
    %p58 = scmp.ne.s32.totalorder %s41, %s57
    %p59 = scmp.eq.s32.totalorder %s19, 0
    %p60 = por %p58, %p59
    %s61 = ssub.s32 %s21, %s28
    %p62 = scmp.eq.s32.totalorder %s61, 0
    %s64 = sadd.s32 %s63, 1
    %s65 = scalar_select %p62, %s63, %s64
    %p68 = pneg %p62
    %p69 = scmp.eq.s32.totalorder %s13, 3
    %p70 = por %p68, %p69
    %p71 = scmp.ne.s32.totalorder %s63, %s66
    %p72 = scmp.eq.s32.totalorder %s13, 0
    %p73 = por %p71, %p72
    %p74 = scmp.ne.s32.totalorder %s63, %s66
    %p75 = scmp.eq.s32.totalorder %s18, 3
    %p76 = por %p74, %p75
    %p77 = scmp.ne.s32.totalorder %s66, %s67
    %p78 = scmp.eq.s32.totalorder %s18, 0
    %p79 = por %p77, %p78
    %p80 = scmp.ne.s32.totalorder %s66, %s67
    %p81 = scmp.eq.s32.totalorder %s19, 3
    %p82 = por %p80, %p81
    %p84 = scmp.ne.s32.totalorder %s67, %s83
    %p85 = scmp.eq.s32.totalorder %s19, 0
    %p86 = por %p84, %p85
    %s88 = sadd.s32 %s87, 1
    %p91 = scmp.eq.s32.totalorder %s13, 3
    %p92 = scmp.ne.s32.totalorder %s87, %s89
    %p93 = scmp.eq.s32.totalorder %s13, 0
    %p94 = por %p92, %p93
    %p95 = scmp.ne.s32.totalorder %s87, %s89
    %p96 = scmp.eq.s32.totalorder %s18, 3
    %p97 = por %p95, %p96
    %p98 = scmp.ne.s32.totalorder %s89, %s90
    %p99 = scmp.eq.s32.totalorder %s18, 0
    %p100 = por %p98, %p99
    %p101 = scmp.ne.s32.totalorder %s89, %s90
    %p102 = scmp.eq.s32.totalorder %s19, 3
    %p103 = por %p101, %p102
    %p105 = scmp.ne.s32.totalorder %s90, %s104
    %p106 = scmp.eq.s32.totalorder %s19, 0
    %p107 = por %p105, %p106
    %s109 = sadd.s32 %s108, 1
    %p112 = scmp.eq.s32.totalorder %s13, 3
    %p113 = scmp.ne.s32.totalorder %s108, %s110
    %p114 = scmp.eq.s32.totalorder %s13, 0
    %p115 = por %p113, %p114
    %p116 = scmp.ne.s32.totalorder %s108, %s110
    %p117 = scmp.eq.s32.totalorder %s18, 3
    %p118 = por %p116, %p117
    %p119 = scmp.ne.s32.totalorder %s110, %s111
    %p120 = scmp.eq.s32.totalorder %s18, 0
    %p121 = por %p119, %p120
    %p122 = scmp.ne.s32.totalorder %s110, %s111
    %p123 = scmp.eq.s32.totalorder %s19, 3
    %p124 = por %p122, %p123
    %p126 = scmp.ne.s32.totalorder %s111, %s125
    %p127 = scmp.eq.s32.totalorder %s19, 0
    %p128 = por %p126, %p127
    %s130 = sadd.s32 %s129, 1
    %p133 = scmp.eq.s32.totalorder %s13, 3
    %p134 = scmp.ne.s32.totalorder %s129, %s131
    %p135 = scmp.eq.s32.totalorder %s13, 0
    %p136 = por %p134, %p135
    %p137 = scmp.ne.s32.totalorder %s129, %s131
    %p138 = scmp.eq.s32.totalorder %s18, 3
    %p139 = por %p137, %p138
    %p140 = scmp.ne.s32.totalorder %s131, %s132
    %p141 = scmp.eq.s32.totalorder %s18, 0
    %p142 = por %p140, %p141
    %p143 = scmp.ne.s32.totalorder %s131, %s132
    %p144 = scmp.eq.s32.totalorder %s19, 3
    %p145 = por %p143, %p144
    %p147 = scmp.ne.s32.totalorder %s132, %s146
    %p148 = scmp.eq.s32.totalorder %s19, 0
    %p149 = por %p147, %p148
    %s150 = ssub.s32 %s20, %s32
    %p151 = scmp.eq.s32.totalorder %s150, 0
    %s153 = sadd.s32 %s152, 1
    %s154 = scalar_select %p151, %s152, %s153
    %p157 = pneg %p151
    %p158 = scmp.eq.s32.totalorder %s13, 3
    %p159 = por %p157, %p158
    %p160 = scmp.ne.s32.totalorder %s152, %s155
    %p161 = scmp.eq.s32.totalorder %s13, 0
    %p162 = por %p160, %p161
    %p163 = scmp.ne.s32.totalorder %s152, %s155
    %p164 = scmp.eq.s32.totalorder %s18, 3
    %p165 = por %p163, %p164
    %p166 = scmp.ne.s32.totalorder %s155, %s156
    %p167 = scmp.eq.s32.totalorder %s18, 0
    %p168 = por %p166, %p167
    %p169 = scmp.ne.s32.totalorder %s155, %s156
    %p170 = scmp.eq.s32.totalorder %s19, 3
    %p171 = por %p169, %p170
    %p173 = scmp.ne.s32.totalorder %s156, %s172
    %p174 = scmp.eq.s32.totalorder %s19, 0
    %p175 = por %p173, %p174
    %s176 = ssub.s32 %s20, %s32
    %p177 = scmp.eq.s32.totalorder %s176, 0
    %s179 = sadd.s32 %s178, 1
    %s180 = scalar_select %p177, %s178, %s179
    %p183 = pneg %p177
    %p184 = scmp.eq.s32.totalorder %s13, 3
    %p185 = por %p183, %p184
    %p186 = scmp.ne.s32.totalorder %s178, %s181
    %p187 = scmp.eq.s32.totalorder %s13, 0
    %p188 = por %p186, %p187
    %p189 = scmp.ne.s32.totalorder %s178, %s181
    %p190 = scmp.eq.s32.totalorder %s18, 3
    %p191 = por %p189, %p190
    %p192 = scmp.ne.s32.totalorder %s181, %s182
    %p193 = scmp.eq.s32.totalorder %s18, 0
    %p194 = por %p192, %p193
    %p195 = scmp.ne.s32.totalorder %s181, %s182
    %p196 = scmp.eq.s32.totalorder %s19, 3
    %p197 = por %p195, %p196
    %p199 = scmp.ne.s32.totalorder %s182, %s198
    %p200 = scmp.eq.s32.totalorder %s19, 0
    %p201 = por %p199, %p200
    %p202 = scmp.le.s32.totalorder 1, %s13
    %p203 = scmp.lt.s32.totalorder %s13, 5
    %p204 = pnand %p202, %p203
    %p205 = pneg %p204
    // Predicated region
    $region9: #{pyramid_pooling_module.2} parent=5 // pred_check
      _
    $region10: #{pyramid_pooling_module.2} parent=5 // pred_check_branch
      %207 = sbr.rel (%p204) target = $region12
    $region11: #{pyramid_pooling_module.2} parent=5 // pred_region
      %s208 = ssub.s32 %s13, 1
      // Predicated region
      $region13: #{pyramid_pooling_module.2} parent=11 // pred_check
        %p209 = pneg %p100
      $region14: #{pyramid_pooling_module.2} parent=11 // pred_check_branch
        %211 = sbr.rel (%p209) target = $region16
      $region15: #{pyramid_pooling_module.2} parent=11 // pred_region
        _
      $region16: #{pyramid_pooling_module.2} parent=11 // pred_fallthru
        _
      // Predicated region
      $region17: #{pyramid_pooling_module.2} parent=11 // pred_check
        %p212 = pneg %p121
      $region18: #{pyramid_pooling_module.2} parent=11 // pred_check_branch
        %214 = sbr.rel (%p212) target = $region20
      $region19: #{pyramid_pooling_module.2} parent=11 // pred_region
        _
      $region20: #{pyramid_pooling_module.2} parent=11 // pred_fallthru
        _
      // Predicated region
      $region21: #{pyramid_pooling_module.2} parent=11 // pred_check
        %p215 = pneg %p142
      $region22: #{pyramid_pooling_module.2} parent=11 // pred_check_branch
        %217 = sbr.rel (%p215) target = $region24
      $region23: #{pyramid_pooling_module.2} parent=11 // pred_region
        _
      $region24: #{pyramid_pooling_module.2} parent=11 // pred_fallthru
        _
    $region12: #{pyramid_pooling_module.2} parent=5 // pred_fallthru
      _
    %p218 = scmp.lt.s32.totalorder %s13, 4
    // Predicated region
    $region25: #{pyramid_pooling_module.2} parent=5 // pred_check
      %p219 = pneg %p218
    $region26: #{pyramid_pooling_module.2} parent=5 // pred_check_branch
      %221 = sbr.rel (%p219) target = $region28
    $region27: #{pyramid_pooling_module.2} parent=5 // pred_region
      // Predicated region
      $region29: #{pyramid_pooling_module.2} parent=27 // pred_check
        %p222 = pneg %p47
      $region30: #{pyramid_pooling_module.2} parent=27 // pred_check_branch
        %224 = sbr.rel (%p222) target = $region32
      $region31: #{pyramid_pooling_module.2} parent=27 // pred_region
        %p225 = scmp.lt.s32.totalorder %s20, 1
        %s226 = scalar_select %p225, %s20, 1
        %p227 = scmp.lt.s32.totalorder %s21, 1
        %s228 = scalar_select %p227, %s21, 1
        %s229 = smul.addr %s226, 2
        %s230 = sadd.s32 %s228, %s229
        %s231 = smul.addr %s230, 4
        %s232 = scalar_lea.vmem %s0, %s231
      $region32: #{pyramid_pooling_module.2} parent=27 // pred_fallthru
        _
      // Predicated region
      $region33: #{pyramid_pooling_module.2} parent=27 // pred_check
        %p233 = pneg %p73
      $region34: #{pyramid_pooling_module.2} parent=27 // pred_check_branch
        %235 = sbr.rel (%p233) target = $region36
      $region35: #{pyramid_pooling_module.2} parent=27 // pred_region
        %s236 = smul.u32 16, %s21
        %p237 = scmp.lt.s32.totalorder %s236, 31
        %s238 = scalar_select %p237, %s236, 31
        %s239 = smul.addr %s238, 4
        %s240 = scalar_lea.vmem %s1, %s239
        %s241 = smul.u32 16, %s21
      $region36: #{pyramid_pooling_module.2} parent=27 // pred_fallthru
        _
    $region28: #{pyramid_pooling_module.2} parent=5 // pred_fallthru
      _
    %p242 = scmp.le.s32.totalorder 1, %s13
    %p243 = scmp.lt.s32.totalorder %s13, 5
    %p244 = pnand %p242, %p243
    %p245 = pneg %p244
    // Predicated region
    $region37: #{pyramid_pooling_module.2} parent=5 // pred_check
      _
    $region38: #{pyramid_pooling_module.2} parent=5 // pred_check_branch
      %247 = sbr.rel (%p244) target = $region40
    $region39: #{pyramid_pooling_module.2} parent=5 // pred_region
      %s248 = ssub.s32 %s13, 1
      %p249 = scmp.lt.s32.totalorder %s22, 1
      %s250 = scalar_select %p249, %s22, 1
      %p251 = scmp.lt.s32.totalorder %s23, 1
      %s252 = scalar_select %p251, %s23, 1
      %s253 = smul.addr %s250, 2
      %s254 = sadd.s32 %s252, %s253
      %s255 = smul.addr %s254, 4
      %s256 = scalar_lea.vmem %s0, %s255
      %p257 = pneg %p53
      %p258 = pneg %p50
      %s259 = smul.u32 16, %s23
      %p260 = scmp.lt.s32.totalorder %s259, 31
      %s261 = scalar_select %p260, %s259, 31
      %s262 = smul.addr %s261, 4
      %s263 = scalar_lea.vmem %s1, %s262
      %p264 = pneg %p79
      %p265 = pneg %p76
      %p266 = pneg %p100
      %p267 = pneg %p97
      %p268 = pneg %p121
      %p269 = pneg %p118
      %p270 = pneg %p142
      %p271 = pneg %p139
      %p272 = pneg %p168
      %p273 = pneg %p165
      %p274 = scmp.lt.s32.totalorder %s22, 1
      %s275 = scalar_select %p274, %s22, 1
      %s276 = smul.addr %s275, 8
      %s277 = scalar_lea.vmem %s5, %s276
      %p278 = pneg %p194
      %p279 = pneg %p191
      %p280 = scmp.lt.s32.totalorder %s22, 1
      %s281 = scalar_select %p280, %s22, 1
      %s282 = smul.addr %s281, 4
      %s283 = scalar_lea.vmem %s6, %s282
      %p284 = scmp.lt.s32.totalorder %s22, 1
      %s285 = scalar_select %p284, %s22, 1
      %p286 = scmp.lt.s32.totalorder %s23, 1
      %s287 = scalar_select %p286, %s23, 1
      %s288 = smul.addr %s285, 2
      %s289 = sadd.s32 %s287, %s288
      %s290 = smul.addr %s289, 4
      %s291 = scalar_lea.vmem %s0, %s290
      %s292 = smul.u32 16, %s23
      %p293 = scmp.lt.s32.totalorder %s292, 31
      %s294 = scalar_select %p293, %s292, 31
      %s295 = smul.addr %s294, 4
      %s296 = scalar_lea.vmem %s1, %s295
      %s297 = smul.u32 16, %s23
      %p298 = scmp.lt.s32.totalorder %s22, 1
      %s299 = scalar_select %p298, %s22, 1
      %s300 = smul.addr %s299, 8
      %s301 = scalar_lea.vmem %s5, %s300
      %p302 = scmp.lt.s32.totalorder %s22, 1
      %s303 = scalar_select %p302, %s22, 1
      %s304 = smul.addr %s303, 4
      %s305 = scalar_lea.vmem %s6, %s304
      %p307 = scmp.eq.s32.totalorder %s23, 0
      // Predicated region
      $region41: #{pyramid_pooling_module.2} parent=39 // pred_check
        %p308 = pneg %p307
      $region42: #{pyramid_pooling_module.2} parent=39 // pred_check_branch
        %310 = sbr.rel (%p308) target = $region44
      $region43: #{pyramid_pooling_module.2} parent=39 // pred_region
        %vm311 = vcmask 408576
        %312 = vst.msk [vmem:[#allocation2] sm:$0xff] %vm311, 0.0
      $region44: #{pyramid_pooling_module.2} parent=39 // pred_fallthru
        _
      %v313 = vld [vmem:[#allocation2] sm:$0xff]
      %v314 = vld [vmem:[%s291] sm:$0xf]
      %v315 = vld [vmem:[%s296] sm:$0xf]
      %v316 = vld [vmem:[%s296 + $0x4] sm:$0xf]
      %v317 = vld [vmem:[%s296 + $0x8] sm:$0xf]
      %v318 = vld [vmem:[%s296 + $0xc] sm:$0xf]
      %v319 = vld [vmem:[%s296 + $0x10] sm:$0xf]
      %v320 = vld [vmem:[%s296 + $0x14] sm:$0xf]
      %v321 = vld [vmem:[%s296 + $0x18] sm:$0xf]
      %v322 = vld [vmem:[%s296 + $0x1c] sm:$0xf]
      %v323 = vld [vmem:[%s296 + $0x20] sm:$0xf]
      %v324 = vld [vmem:[%s296 + $0x24] sm:$0xf]
      %v325 = vld [vmem:[%s296 + $0x28] sm:$0xf]
      %v326 = vld [vmem:[%s296 + $0x2c] sm:$0xf]
      %v327 = vld [vmem:[%s296 + $0x30] sm:$0xf]
      %v328 = vld [vmem:[%s296 + $0x34] sm:$0xf]
      %v329 = vld [vmem:[%s296 + $0x38] sm:$0xf]
      %v330 = vld [vmem:[%s296 + $0x3c] sm:$0xf]
      %v347 = vunpack.c.l.b16 %v315
      %v348 = vunpack.c.l.b16 %v316
      %v349 = vunpack.c.l.b16 %v317
      %v350 = vunpack.c.l.b16 %v318
      %v351 = vunpack.c.l.b16 %v319
      %v352 = vunpack.c.l.b16 %v320
      %v353 = vunpack.c.l.b16 %v321
      %v354 = vunpack.c.l.b16 %v322
      %v355 = vunpack.c.l.b16 %v323
      %v356 = vunpack.c.l.b16 %v324
      %v357 = vunpack.c.l.b16 %v325
      %v358 = vunpack.c.l.b16 %v326
      %v359 = vunpack.c.l.b16 %v327
      %v360 = vunpack.c.l.b16 %v328
      %v361 = vunpack.c.l.b16 %v329
      %v362 = vunpack.c.l.b16 %v330
      %v363 = vpack.c.b16 %v348, %v347
      %v364 = vpack.c.b16 %v350, %v349
      %v365 = vpack.c.b16 %v352, %v351
      %v366 = vpack.c.b16 %v354, %v353
      %v367 = vpack.c.b16 %v356, %v355
      %v368 = vpack.c.b16 %v358, %v357
      %v369 = vpack.c.b16 %v360, %v359
      %v370 = vpack.c.b16 %v362, %v361
      %379 = vmatprep.subr.bf16.mxu0 0
      %380 = vmatpush1.bf16.msra.mxu0 %v370
      %381 = vmatprep.subr.bf16.mxu0 0
      %382 = vmatpush1.bf16.msra.mxu0 %v369
      %383 = vmatprep.subr.bf16.mxu0 0
      %384 = vmatpush1.bf16.msra.mxu0 %v368
      %385 = vmatprep.subr.bf16.mxu0 0
      %386 = vmatpush1.bf16.msra.mxu0 %v367
      %387 = vmatprep.subr.bf16.mxu0 0
      %388 = vmatpush1.bf16.msra.mxu0 %v366
      %389 = vmatprep.subr.bf16.mxu0 0
      %390 = vmatpush1.bf16.msra.mxu0 %v365
      %391 = vmatprep.subr.bf16.mxu0 0
      %392 = vmatpush1.bf16.msra.mxu0 %v364
      %393 = vmatprep.subr.bf16.mxu0 0
      %394 = vmatpush1.bf16.msra.mxu0 %v363
      %395 = vmatprep.subr.bf16.mxu0 0
      %396 = vmatpush2.bf16.msra.mxu0 0
      %397 = vmatprep.subr.bf16.mxu0 0
      %398 = vmatpush2.bf16.msra.mxu0 0
      %399 = vmatprep.subr.bf16.mxu0 0
      %400 = vmatpush2.bf16.msra.mxu0 0
      %401 = vmatprep.subr.bf16.mxu0 0
      %402 = vmatpush2.bf16.msra.mxu0 0
      %403 = vmatprep.subr.bf16.mxu0 0
      %404 = vmatpush2.bf16.msra.mxu0 0
      %405 = vmatprep.subr.bf16.mxu0 0
      %406 = vmatpush2.bf16.msra.mxu0 0
      %407 = vmatprep.subr.bf16.mxu0 0
      %408 = vmatpush2.bf16.msra.mxu0 0
      %409 = vmatprep.subr.bf16.mxu0 0
      %410 = vmatpush2.bf16.msra.mxu0 0
      %411 = vmatprep.mubr.bf16.mxu0 0
      %412 = vmatmul.mubr.bf16.gmra.mxu0 %v314
      %v413 = vpop.f32.mrf.mxu0
      %v414 = vadd.f32 0.0, %v413
      %v415 = vpop.f32.mrf.mxu0
      %v416 = vpop.f32.mrf.mxu0
      %v417 = vpop.f32.mrf.mxu0
      %418 = vdwg.mxu0
      %v419 = vadd.f32 %v313, %v414
      %vm420 = vcmask 408576
      %421 = vst.msk [vmem:[#allocation2] sm:$0xff] %vm420, %v419
      %p422 = scmp.eq.s32.totalorder %s23, 1
      // Predicated region
      $region45: #{pyramid_pooling_module.2} parent=39 // pred_check
        %p423 = pneg %p422
      $region46: #{pyramid_pooling_module.2} parent=39 // pred_check_branch
        %425 = sbr.rel (%p423) target = $region48
      $region47: #{pyramid_pooling_module.2} parent=39 // pred_region
        %v426 = vld [vmem:[#allocation2] sm:$0xff]
        %v427 = vpack.c.bf16 %v426, %v426
        %v428 = vld [vmem:[%s2] sm:$0xf]
        %v429 = vld [vmem:[%s2 + $0x4] sm:$0xf]
        %v430 = vld [vmem:[%s3] sm:$0xff]
        %v431 = vld [vmem:[%s3 + $0x8] sm:$0xff]
        %v434 = vunpack.c.l.b16 %v428
        %v435 = vunpack.c.l.b16 %v429
        %v436 = vpack.c.b16 %v435, %v434
        %vm437 = vcmask 64512
        %v439 = vsel %vm437, %v436, 0
        %vm441 = vcmask 1043456
        %v443 = vsel %vm441, %v427, 0
        %445 = vmatprep.subr.bf16.mxu0 0
        %446 = vmatpush1.bf16.msra.mxu0 0
        %447 = vmatprep.subr.bf16.mxu0 0
        %448 = vmatpush1.bf16.msra.mxu0 0
        %449 = vmatprep.subr.bf16.mxu0 0
        %450 = vmatpush1.bf16.msra.mxu0 0
        %451 = vmatprep.subr.bf16.mxu0 0
        %452 = vmatpush1.bf16.msra.mxu0 0
        %453 = vmatprep.subr.bf16.mxu0 0
        %454 = vmatpush1.bf16.msra.mxu0 0
        %455 = vmatprep.subr.bf16.mxu0 0
        %456 = vmatpush1.bf16.msra.mxu0 0
        %457 = vmatprep.subr.bf16.mxu0 0
        %458 = vmatpush1.bf16.msra.mxu0 0
        %459 = vmatprep.subr.bf16.mxu0 0
        %460 = vmatpush1.bf16.msra.mxu0 %v443
        %461 = vmatprep.subr.bf16.mxu0 0
        %462 = vmatpush2.bf16.msra.mxu0 0
        %463 = vmatprep.subr.bf16.mxu0 0
        %464 = vmatpush2.bf16.msra.mxu0 0
        %465 = vmatprep.subr.bf16.mxu0 0
        %466 = vmatpush2.bf16.msra.mxu0 0
        %467 = vmatprep.subr.bf16.mxu0 0
        %468 = vmatpush2.bf16.msra.mxu0 0
        %469 = vmatprep.subr.bf16.mxu0 0
        %470 = vmatpush2.bf16.msra.mxu0 0
        %471 = vmatprep.subr.bf16.mxu0 0
        %472 = vmatpush2.bf16.msra.mxu0 0
        %473 = vmatprep.subr.bf16.mxu0 0
        %474 = vmatpush2.bf16.msra.mxu0 0
        %475 = vmatprep.subr.bf16.mxu0 0
        %476 = vmatpush2.bf16.msra.mxu0 0
        %477 = vmatprep.mubr.bf16.mxu0 0
        %478 = vmatmul.mubr.bf16.gmra.mxu0 %v439
        %v479 = vpop.f32.mrf.mxu0
        %v480 = vadd.f32 %v430, %v479
        %v481 = vpop.f32.mrf.mxu0
        %v482 = vpop.f32.mrf.mxu0
        %v483 = vadd.f32 %v431, %v482
        %v484 = vpop.f32.mrf.mxu0
        %485 = vdwg.mxu0
        %v486 = vmax.f32 %v480, 0.0
        %v487 = vmax.f32 %v483, 0.0
        %v488 = vpack.c.bf16 %v487, %v486
        %v489 = vld [vmem:[%s4] sm:$0xf]
        %vm490 = vcmask 130048
        %v492 = vsel %vm490, %v489, 0
        %494 = vmatprep.subr.bf16.mxu0 0
        %495 = vmatpush1.bf16.msra.mxu0 0
        %496 = vmatprep.subr.bf16.mxu0 0
        %497 = vmatpush1.bf16.msra.mxu0 0
        %498 = vmatprep.subr.bf16.mxu0 0
        %499 = vmatpush1.bf16.msra.mxu0 0
        %500 = vmatprep.subr.bf16.mxu0 0
        %501 = vmatpush1.bf16.msra.mxu0 0
        %502 = vmatprep.subr.bf16.mxu0 0
        %503 = vmatpush1.bf16.msra.mxu0 0
        %504 = vmatprep.subr.bf16.mxu0 0
        %505 = vmatpush1.bf16.msra.mxu0 0
        %506 = vmatprep.subr.bf16.mxu0 0
        %507 = vmatpush1.bf16.msra.mxu0 0
        %508 = vmatprep.subr.bf16.mxu0 0
        %509 = vmatpush1.bf16.msra.mxu0 %v488
        %510 = vmatprep.subr.bf16.mxu0 0
        %511 = vmatpush2.bf16.msra.mxu0 0
        %512 = vmatprep.subr.bf16.mxu0 0
        %513 = vmatpush2.bf16.msra.mxu0 0
        %514 = vmatprep.subr.bf16.mxu0 0
        %515 = vmatpush2.bf16.msra.mxu0 0
        %516 = vmatprep.subr.bf16.mxu0 0
        %517 = vmatpush2.bf16.msra.mxu0 0
        %518 = vmatprep.subr.bf16.mxu0 0
        %519 = vmatpush2.bf16.msra.mxu0 0
        %520 = vmatprep.subr.bf16.mxu0 0
        %521 = vmatpush2.bf16.msra.mxu0 0
        %522 = vmatprep.subr.bf16.mxu0 0
        %523 = vmatpush2.bf16.msra.mxu0 0
        %524 = vmatprep.subr.bf16.mxu0 0
        %525 = vmatpush2.bf16.msra.mxu0 0
        %526 = vmatprep.mubr.bf16.mxu0 0
        %527 = vmatmul.mubr.bf16.gmra.mxu0 %v492
        %v528 = vpop.f32.mrf.mxu0
        %v529 = vadd.f32 0.0, %v528
        %v530 = vpop.f32.mrf.mxu0
        %v531 = vpop.f32.mrf.mxu0
        %v532 = vpop.f32.mrf.mxu0
        %533 = vdwg.mxu0
        %s534 = scalar_lea.vmem %s2, 8
        %v535 = vld [vmem:[%s534] sm:$0xf]
        %v536 = vld [vmem:[%s534 + $0x4] sm:$0xf]
        %s537 = scalar_lea.vmem %s3, 16
        %v538 = vld [vmem:[%s537] sm:$0xff]
        %v539 = vld [vmem:[%s537 + $0x8] sm:$0xff]
        %541 = vset.pattern.permute.xlu0 0
        %542 = vperm.xlu0 %541, %v538
        %v543 = vpop.permute.xlu0 %542
        %546 = vset.pattern.permute.xlu0 0
        %547 = vperm.xlu0 %546, %v539
        %v548 = vpop.permute.xlu0 %547
        %v552 = vunpack.c.l.b16 %v535
        %v553 = vunpack.c.l.b16 %v536
        %v554 = vpack.c.b16 %v553, %v552
        %556 = vrot.lane.b32.xlu0 %v427, 127
        %v557 = vpop.permute.xlu0 %556
        %v559 = vsel %vm437, %v554, 0
        %v562 = vsel %vm441, %v557, 0
        %564 = vmatprep.subr.bf16.mxu0 0
        %565 = vmatpush1.bf16.msra.mxu0 0
        %566 = vmatprep.subr.bf16.mxu0 0
        %567 = vmatpush1.bf16.msra.mxu0 0
        %568 = vmatprep.subr.bf16.mxu0 0
        %569 = vmatpush1.bf16.msra.mxu0 0
        %570 = vmatprep.subr.bf16.mxu0 0
        %571 = vmatpush1.bf16.msra.mxu0 0
        %572 = vmatprep.subr.bf16.mxu0 0
        %573 = vmatpush1.bf16.msra.mxu0 0
        %574 = vmatprep.subr.bf16.mxu0 0
        %575 = vmatpush1.bf16.msra.mxu0 0
        %576 = vmatprep.subr.bf16.mxu0 0
        %577 = vmatpush1.bf16.msra.mxu0 0
        %578 = vmatprep.subr.bf16.mxu0 0
        %579 = vmatpush1.bf16.msra.mxu0 %v562
        %580 = vmatprep.subr.bf16.mxu0 0
        %581 = vmatpush2.bf16.msra.mxu0 0
        %582 = vmatprep.subr.bf16.mxu0 0
        %583 = vmatpush2.bf16.msra.mxu0 0
        %584 = vmatprep.subr.bf16.mxu0 0
        %585 = vmatpush2.bf16.msra.mxu0 0
        %586 = vmatprep.subr.bf16.mxu0 0
        %587 = vmatpush2.bf16.msra.mxu0 0
        %588 = vmatprep.subr.bf16.mxu0 0
        %589 = vmatpush2.bf16.msra.mxu0 0
        %590 = vmatprep.subr.bf16.mxu0 0
        %591 = vmatpush2.bf16.msra.mxu0 0
        %592 = vmatprep.subr.bf16.mxu0 0
        %593 = vmatpush2.bf16.msra.mxu0 0
        %594 = vmatprep.subr.bf16.mxu0 0
        %595 = vmatpush2.bf16.msra.mxu0 0
        %596 = vmatprep.mubr.bf16.mxu0 0
        %597 = vmatmul.mubr.bf16.gmra.mxu0 %v559
        %v598 = vpop.f32.mrf.mxu0
        %v599 = vadd.f32 %v543, %v598
        %v600 = vpop.f32.mrf.mxu0
        %v601 = vpop.f32.mrf.mxu0
        %v602 = vadd.f32 %v548, %v601
        %v603 = vpop.f32.mrf.mxu0
        %604 = vdwg.mxu0
        %v605 = vmax.f32 %v599, 0.0
        %v606 = vmax.f32 %v602, 0.0
        %v607 = vpack.c.bf16 %v606, %v605
        %s608 = scalar_lea.vmem %s4, 4
        %v609 = vld [vmem:[%s608] sm:$0xf]
        %v611 = vsel %vm490, %v609, 0
        %613 = vmatprep.subr.bf16.mxu0 0
        %614 = vmatpush1.bf16.msra.mxu0 0
        %615 = vmatprep.subr.bf16.mxu0 0
        %616 = vmatpush1.bf16.msra.mxu0 0
        %617 = vmatprep.subr.bf16.mxu0 0
        %618 = vmatpush1.bf16.msra.mxu0 0
        %619 = vmatprep.subr.bf16.mxu0 0
        %620 = vmatpush1.bf16.msra.mxu0 0
        %621 = vmatprep.subr.bf16.mxu0 0
        %622 = vmatpush1.bf16.msra.mxu0 0
        %623 = vmatprep.subr.bf16.mxu0 0
        %624 = vmatpush1.bf16.msra.mxu0 0
        %625 = vmatprep.subr.bf16.mxu0 0
        %626 = vmatpush1.bf16.msra.mxu0 0
        %627 = vmatprep.subr.bf16.mxu0 0
        %628 = vmatpush1.bf16.msra.mxu0 %v607
        %629 = vmatprep.subr.bf16.mxu0 0
        %630 = vmatpush2.bf16.msra.mxu0 0
        %631 = vmatprep.subr.bf16.mxu0 0
        %632 = vmatpush2.bf16.msra.mxu0 0
        %633 = vmatprep.subr.bf16.mxu0 0
        %634 = vmatpush2.bf16.msra.mxu0 0
        %635 = vmatprep.subr.bf16.mxu0 0
        %636 = vmatpush2.bf16.msra.mxu0 0
        %637 = vmatprep.subr.bf16.mxu0 0
        %638 = vmatpush2.bf16.msra.mxu0 0
        %639 = vmatprep.subr.bf16.mxu0 0
        %640 = vmatpush2.bf16.msra.mxu0 0
        %641 = vmatprep.subr.bf16.mxu0 0
        %642 = vmatpush2.bf16.msra.mxu0 0
        %643 = vmatprep.subr.bf16.mxu0 0
        %644 = vmatpush2.bf16.msra.mxu0 0
        %645 = vmatprep.mubr.bf16.mxu0 0
        %646 = vmatmul.mubr.bf16.gmra.mxu0 %v611
        %v647 = vpop.f32.mrf.mxu0
        %v648 = vadd.f32 0.0, %v647
        %v649 = vpop.f32.mrf.mxu0
        %v650 = vpop.f32.mrf.mxu0
        %v651 = vpop.f32.mrf.mxu0
        %652 = vdwg.mxu0
        %s653 = scalar_lea.vmem %s2, 16
        %v654 = vld [vmem:[%s653] sm:$0xf]
        %v655 = vld [vmem:[%s653 + $0x4] sm:$0xf]
        %s656 = scalar_lea.vmem %s3, 32
        %v657 = vld [vmem:[%s656] sm:$0xff]
        %v658 = vld [vmem:[%s656 + $0x8] sm:$0xff]
        %660 = vset.pattern.permute.xlu0 0
        %661 = vperm.xlu0 %660, %v657
        %v662 = vpop.permute.xlu0 %661
        %665 = vset.pattern.permute.xlu0 0
        %666 = vperm.xlu0 %665, %v658
        %v667 = vpop.permute.xlu0 %666
        %v671 = vunpack.c.l.b16 %v654
        %v672 = vunpack.c.l.b16 %v655
        %v673 = vpack.c.b16 %v672, %v671
        %674 = vrot.lane.b32.xlu0 %v427, 123
        %v675 = vpop.permute.xlu0 %674
        %v677 = vsel %vm437, %v673, 0
        %v680 = vsel %vm441, %v675, 0
        %682 = vmatprep.subr.bf16.mxu0 0
        %683 = vmatpush1.bf16.msra.mxu0 0
        %684 = vmatprep.subr.bf16.mxu0 0
        %685 = vmatpush1.bf16.msra.mxu0 0
        %686 = vmatprep.subr.bf16.mxu0 0
        %687 = vmatpush1.bf16.msra.mxu0 0
        %688 = vmatprep.subr.bf16.mxu0 0
        %689 = vmatpush1.bf16.msra.mxu0 0
        %690 = vmatprep.subr.bf16.mxu0 0
        %691 = vmatpush1.bf16.msra.mxu0 0
        %692 = vmatprep.subr.bf16.mxu0 0
        %693 = vmatpush1.bf16.msra.mxu0 0
        %694 = vmatprep.subr.bf16.mxu0 0
        %695 = vmatpush1.bf16.msra.mxu0 0
        %696 = vmatprep.subr.bf16.mxu0 0
        %697 = vmatpush1.bf16.msra.mxu0 %v680
        %698 = vmatprep.subr.bf16.mxu0 0
        %699 = vmatpush2.bf16.msra.mxu0 0
        %700 = vmatprep.subr.bf16.mxu0 0
        %701 = vmatpush2.bf16.msra.mxu0 0
        %702 = vmatprep.subr.bf16.mxu0 0
        %703 = vmatpush2.bf16.msra.mxu0 0
        %704 = vmatprep.subr.bf16.mxu0 0
        %705 = vmatpush2.bf16.msra.mxu0 0
        %706 = vmatprep.subr.bf16.mxu0 0
        %707 = vmatpush2.bf16.msra.mxu0 0
        %708 = vmatprep.subr.bf16.mxu0 0
        %709 = vmatpush2.bf16.msra.mxu0 0
        %710 = vmatprep.subr.bf16.mxu0 0
        %711 = vmatpush2.bf16.msra.mxu0 0
        %712 = vmatprep.subr.bf16.mxu0 0
        %713 = vmatpush2.bf16.msra.mxu0 0
        %714 = vmatprep.mubr.bf16.mxu0 0
        %715 = vmatmul.mubr.bf16.gmra.mxu0 %v677
        %v716 = vpop.f32.mrf.mxu0
        %v717 = vadd.f32 %v662, %v716
        %v718 = vpop.f32.mrf.mxu0
        %v719 = vpop.f32.mrf.mxu0
        %v720 = vadd.f32 %v667, %v719
        %v721 = vpop.f32.mrf.mxu0
        %722 = vdwg.mxu0
        %v723 = vmax.f32 %v717, 0.0
        %v724 = vmax.f32 %v720, 0.0
        %v725 = vpack.c.bf16 %v724, %v723
        %s726 = scalar_lea.vmem %s4, 8
        %v727 = vld [vmem:[%s726] sm:$0xf]
        %v729 = vsel %vm490, %v727, 0
        %731 = vmatprep.subr.bf16.mxu0 0
        %732 = vmatpush1.bf16.msra.mxu0 0
        %733 = vmatprep.subr.bf16.mxu0 0
        %734 = vmatpush1.bf16.msra.mxu0 0
        %735 = vmatprep.subr.bf16.mxu0 0
        %736 = vmatpush1.bf16.msra.mxu0 0
        %737 = vmatprep.subr.bf16.mxu0 0
        %738 = vmatpush1.bf16.msra.mxu0 0
        %739 = vmatprep.subr.bf16.mxu0 0
        %740 = vmatpush1.bf16.msra.mxu0 0
        %741 = vmatprep.subr.bf16.mxu0 0
        %742 = vmatpush1.bf16.msra.mxu0 0
        %743 = vmatprep.subr.bf16.mxu0 0
        %744 = vmatpush1.bf16.msra.mxu0 0
        %745 = vmatprep.subr.bf16.mxu0 0
        %746 = vmatpush1.bf16.msra.mxu0 %v725
        %747 = vmatprep.subr.bf16.mxu0 0
        %748 = vmatpush2.bf16.msra.mxu0 0
        %749 = vmatprep.subr.bf16.mxu0 0
        %750 = vmatpush2.bf16.msra.mxu0 0
        %751 = vmatprep.subr.bf16.mxu0 0
        %752 = vmatpush2.bf16.msra.mxu0 0
        %753 = vmatprep.subr.bf16.mxu0 0
        %754 = vmatpush2.bf16.msra.mxu0 0
        %755 = vmatprep.subr.bf16.mxu0 0
        %756 = vmatpush2.bf16.msra.mxu0 0
        %757 = vmatprep.subr.bf16.mxu0 0
        %758 = vmatpush2.bf16.msra.mxu0 0
        %759 = vmatprep.subr.bf16.mxu0 0
        %760 = vmatpush2.bf16.msra.mxu0 0
        %761 = vmatprep.subr.bf16.mxu0 0
        %762 = vmatpush2.bf16.msra.mxu0 0
        %763 = vmatprep.mubr.bf16.mxu0 0
        %764 = vmatmul.mubr.bf16.gmra.mxu0 %v729
        %v765 = vpop.f32.mrf.mxu0
        %v766 = vadd.f32 0.0, %v765
        %v767 = vpop.f32.mrf.mxu0
        %v768 = vpop.f32.mrf.mxu0
        %v769 = vpop.f32.mrf.mxu0
        %770 = vdwg.mxu0
        %s771 = scalar_lea.vmem %s2, 24
        %v772 = vld [vmem:[%s771] sm:$0xf]
        %v773 = vld [vmem:[%s771 + $0x4] sm:$0xf]
        %s774 = scalar_lea.vmem %s3, 48
        %v775 = vld [vmem:[%s774] sm:$0xff]
        %v776 = vld [vmem:[%s774 + $0x8] sm:$0xff]
        %778 = vset.pattern.permute.xlu0 0
        %779 = vperm.xlu0 %778, %v775
        %v780 = vpop.permute.xlu0 %779
        %783 = vset.pattern.permute.xlu0 0
        %784 = vperm.xlu0 %783, %v776
        %v785 = vpop.permute.xlu0 %784
        %v789 = vunpack.c.l.b16 %v772
        %v790 = vunpack.c.l.b16 %v773
        %v791 = vpack.c.b16 %v790, %v789
        %792 = vrot.lane.b32.xlu0 %v427, 114
        %v793 = vpop.permute.xlu0 %792
        %v795 = vsel %vm437, %v791, 0
        %v798 = vsel %vm441, %v793, 0
        %800 = vmatprep.subr.bf16.mxu0 0
        %801 = vmatpush1.bf16.msra.mxu0 0
        %802 = vmatprep.subr.bf16.mxu0 0
        %803 = vmatpush1.bf16.msra.mxu0 0
        %804 = vmatprep.subr.bf16.mxu0 0
        %805 = vmatpush1.bf16.msra.mxu0 0
        %806 = vmatprep.subr.bf16.mxu0 0
        %807 = vmatpush1.bf16.msra.mxu0 0
        %808 = vmatprep.subr.bf16.mxu0 0
        %809 = vmatpush1.bf16.msra.mxu0 0
        %810 = vmatprep.subr.bf16.mxu0 0
        %811 = vmatpush1.bf16.msra.mxu0 0
        %812 = vmatprep.subr.bf16.mxu0 0
        %813 = vmatpush1.bf16.msra.mxu0 0
        %814 = vmatprep.subr.bf16.mxu0 0
        %815 = vmatpush1.bf16.msra.mxu0 %v798
        %816 = vmatprep.subr.bf16.mxu0 0
        %817 = vmatpush2.bf16.msra.mxu0 0
        %818 = vmatprep.subr.bf16.mxu0 0
        %819 = vmatpush2.bf16.msra.mxu0 0
        %820 = vmatprep.subr.bf16.mxu0 0
        %821 = vmatpush2.bf16.msra.mxu0 0
        %822 = vmatprep.subr.bf16.mxu0 0
        %823 = vmatpush2.bf16.msra.mxu0 0
        %824 = vmatprep.subr.bf16.mxu0 0
        %825 = vmatpush2.bf16.msra.mxu0 0
        %826 = vmatprep.subr.bf16.mxu0 0
        %827 = vmatpush2.bf16.msra.mxu0 0
        %828 = vmatprep.subr.bf16.mxu0 0
        %829 = vmatpush2.bf16.msra.mxu0 0
        %830 = vmatprep.subr.bf16.mxu0 0
        %831 = vmatpush2.bf16.msra.mxu0 0
        %832 = vmatprep.mubr.bf16.mxu0 0
        %833 = vmatmul.mubr.bf16.gmra.mxu0 %v795
        %v834 = vpop.f32.mrf.mxu0
        %v835 = vadd.f32 %v780, %v834
        %v836 = vpop.f32.mrf.mxu0
        %v837 = vpop.f32.mrf.mxu0
        %v838 = vadd.f32 %v785, %v837
        %v839 = vpop.f32.mrf.mxu0
        %840 = vdwg.mxu0
        %v841 = vmax.f32 %v835, 0.0
        %v842 = vmax.f32 %v838, 0.0
        %v843 = vpack.c.bf16 %v842, %v841
        %s844 = scalar_lea.vmem %s4, 12
        %v845 = vld [vmem:[%s844] sm:$0xf]
        %v847 = vsel %vm490, %v845, 0
        %849 = vmatprep.subr.bf16.mxu0 0
        %850 = vmatpush1.bf16.msra.mxu0 0
        %851 = vmatprep.subr.bf16.mxu0 0
        %852 = vmatpush1.bf16.msra.mxu0 0
        %853 = vmatprep.subr.bf16.mxu0 0
        %854 = vmatpush1.bf16.msra.mxu0 0
        %855 = vmatprep.subr.bf16.mxu0 0
        %856 = vmatpush1.bf16.msra.mxu0 0
        %857 = vmatprep.subr.bf16.mxu0 0
        %858 = vmatpush1.bf16.msra.mxu0 0
        %859 = vmatprep.subr.bf16.mxu0 0
        %860 = vmatpush1.bf16.msra.mxu0 0
        %861 = vmatprep.subr.bf16.mxu0 0
        %862 = vmatpush1.bf16.msra.mxu0 0
        %863 = vmatprep.subr.bf16.mxu0 0
        %864 = vmatpush1.bf16.msra.mxu0 %v843
        %865 = vmatprep.subr.bf16.mxu0 0
        %866 = vmatpush2.bf16.msra.mxu0 0
        %867 = vmatprep.subr.bf16.mxu0 0
        %868 = vmatpush2.bf16.msra.mxu0 0
        %869 = vmatprep.subr.bf16.mxu0 0
        %870 = vmatpush2.bf16.msra.mxu0 0
        %871 = vmatprep.subr.bf16.mxu0 0
        %872 = vmatpush2.bf16.msra.mxu0 0
        %873 = vmatprep.subr.bf16.mxu0 0
        %874 = vmatpush2.bf16.msra.mxu0 0
        %875 = vmatprep.subr.bf16.mxu0 0
        %876 = vmatpush2.bf16.msra.mxu0 0
        %877 = vmatprep.subr.bf16.mxu0 0
        %878 = vmatpush2.bf16.msra.mxu0 0
        %879 = vmatprep.subr.bf16.mxu0 0
        %880 = vmatpush2.bf16.msra.mxu0 0
        %881 = vmatprep.mubr.bf16.mxu0 0
        %882 = vmatmul.mubr.bf16.gmra.mxu0 %v847
        %v883 = vpop.f32.mrf.mxu0
        %v884 = vadd.f32 0.0, %v883
        %v885 = vpop.f32.mrf.mxu0
        %v886 = vpop.f32.mrf.mxu0
        %v887 = vpop.f32.mrf.mxu0
        %888 = vdwg.mxu0
        %vm889 = vcmask 7168
        %890 = vst.msk [vmem:[%s301] sm:$0xff] %vm889, %v529
        %892 = vrot.lane.b32.xlu0 %v766, 4
        %v893 = vpop.permute.xlu0 %892
        %896 = vrot.lane.b32.xlu0 %v884, 13
        %v897 = vpop.permute.xlu0 %896
        %vm899 = vcmask 31744
        %v900 = vsel %vm899, %v648, %v893
        %vm901 = vcmask 105472
        %v902 = vsel %vm901, %v900, %v897
        %v903 = vpack.c.bf16 %v902, %v902
        %vm904 = vcmask 396288
        %905 = vst.msk [vmem:[%s305] sm:$0xf] %vm904, %v903
      $region48: #{pyramid_pooling_module.2} parent=39 // pred_fallthru
        _
      %p906 = scmp.lt.s32.totalorder %s22, 1
      %s907 = scalar_select %p906, %s22, 1
      %s908 = smul.addr %s907, 8
      %s909 = scalar_lea.vmem %s5, %s908
      %p910 = scmp.lt.s32.totalorder %s22, 1
      %s911 = scalar_select %p910, %s22, 1
      %s912 = smul.addr %s911, 4
      %s913 = scalar_lea.vmem %s6, %s912
      // Predicated region
      $region49: #{pyramid_pooling_module.2} parent=39 // pred_check
        %p914 = pneg %p165
      $region50: #{pyramid_pooling_module.2} parent=39 // pred_check_branch
        %916 = sbr.rel (%p914) target = $region52
      $region51: #{pyramid_pooling_module.2} parent=39 // pred_region
        _
      $region52: #{pyramid_pooling_module.2} parent=39 // pred_fallthru
        _
      // Predicated region
      $region53: #{pyramid_pooling_module.2} parent=39 // pred_check
        %p917 = pneg %p191
      $region54: #{pyramid_pooling_module.2} parent=39 // pred_check_branch
        %919 = sbr.rel (%p917) target = $region56
      $region55: #{pyramid_pooling_module.2} parent=39 // pred_region
        _
      $region56: #{pyramid_pooling_module.2} parent=39 // pred_fallthru
        _
    $region40: #{pyramid_pooling_module.2} parent=5 // pred_fallthru
      _
    %p920 = scmp.le.s32.totalorder 2, %s13
    // Predicated region
    $region57: #{pyramid_pooling_module.2} parent=5 // pred_check
      %p921 = pneg %p920
    $region58: #{pyramid_pooling_module.2} parent=5 // pred_check_branch
      %923 = sbr.rel (%p921) target = $region60
    $region59: #{pyramid_pooling_module.2} parent=5 // pred_region
      %s924 = ssub.s32 %s13, 2
      // Predicated region
      $region61: #{pyramid_pooling_module.2} parent=59 // pred_check
        %p925 = pneg %p171
      $region62: #{pyramid_pooling_module.2} parent=59 // pred_check_branch
        %927 = sbr.rel (%p925) target = $region64
      $region63: #{pyramid_pooling_module.2} parent=59 // pred_region
        %p928 = scmp.lt.s32.totalorder %s24, 1
        %s929 = scalar_select %p928, %s24, 1
        %s930 = smul.addr %s929, 8
        %s931 = scalar_lea.vmem %s5, %s930
      $region64: #{pyramid_pooling_module.2} parent=59 // pred_fallthru
        _
      // Predicated region
      $region65: #{pyramid_pooling_module.2} parent=59 // pred_check
        %p932 = pneg %p197
      $region66: #{pyramid_pooling_module.2} parent=59 // pred_check_branch
        %934 = sbr.rel (%p932) target = $region68
      $region67: #{pyramid_pooling_module.2} parent=59 // pred_region
        %p935 = scmp.lt.s32.totalorder %s24, 1
        %s936 = scalar_select %p935, %s24, 1
        %s937 = smul.addr %s936, 4
        %s938 = scalar_lea.vmem %s6, %s937
      $region68: #{pyramid_pooling_module.2} parent=59 // pred_fallthru
        _
    $region60: #{pyramid_pooling_module.2} parent=5 // pred_fallthru
      _
  $region6: #{pyramid_pooling_module.2} parent=0 // loop_footer
    %s17 = sadd.s32 1, %s13
  $region7: #{pyramid_pooling_module.2} parent=0 // loop_footer_branch
    %12 = sbr.rel target = $region3
  $region8: #{pyramid_pooling_module.2} parent=0 // loop_exit
    _

</llo_original>
